<compile_context>
chip_gen: v6e
topology: v6e:2x2x1
jax: 0.10.0
libtpu: 0.0.40
codegen_flags: <defaults>
</compile_context>

<pallas_src>
import functools

import jax
import jax.numpy as jnp
from jax import lax
from jax.experimental import pallas as pl
from jax.experimental.pallas import tpu as pltpu


# ----------------------- backend-aware global config ------------------------

def _default_compute_dtype():
    # bf16 feeds the MXU on real TPUs; everywhere else (CPU interpret runs)
    # stay in f32 so the fallback dot runtime accepts the operands.
    try:
        return jnp.bfloat16 if jax.default_backend() == "tpu" else jnp.float32
    except Exception:
        return jnp.float32


def _default_vmem_limit():
    # Generation-aware scoped-VMEM budget (v5e/v6e: 128 MiB, v7x: 64 MiB).
    try:
        if jax.default_backend() == "tpu":
            return int(pltpu.get_tpu_info().vmem_capacity_bytes * 3 // 4)
    except Exception:
        pass
    return 64 * 1024 * 1024


_COMPUTE_DTYPE = _default_compute_dtype()
_VMEM_LIMIT = _default_vmem_limit()


# ----------------------------- Pallas kernels -------------------------------

def _gemm_bias_kernel(w_ref, x_ref, b_ref, o_ref):
    # w: (Cout, K), x: (K, TM) in compute dtype; b: (Cout, 1) f32.
    acc = jnp.dot(w_ref[...], x_ref[...], preferred_element_type=jnp.float32)
    o_ref[...] = (acc + b_ref[...]).astype(o_ref.dtype)


def _attn_kernel(q_ref, k_ref, v_ref, o_ref):
    # One batch element per grid step.
    # q, k: (N, A); v: (Nv, A); output: (A, Nv)  (lane-dense, Nv is large).
    q = q_ref[0]
    k = k_ref[0]
    v = v_ref[0]
    # s[a, c] = sum_n q[n, a] * k[n, c]    (torch: bmm(q^T, k))
    s = lax.dot_general(q, k, (((0,), (0,)), ((), ())),
                        preferred_element_type=jnp.float32)
    s = s - jnp.max(s, axis=-1, keepdims=True)      # stable softmax(dim=-1)
    p = jnp.exp(s)
    p = p / jnp.sum(p, axis=-1, keepdims=True)
    # out[a, m] = sum_c p[a, c] * v[m, c]  (== torch bmm(v, p^T) transposed)
    o = lax.dot_general(p.astype(v.dtype), v, (((1,), (1,)), ((), ())),
                        preferred_element_type=jnp.float32)
    o_ref[0] = o.astype(o_ref.dtype)


# ------------------------------ GEMM wrapper ---------------------------------

def _pick_tm(M, K, Cout, itemsize):
    # Lanes per grid step: large enough to approach the HBM roofline
    # (>=512-1024 lanes), capped by a per-step VMEM working-set budget.
    budget = 8 * 1024 * 1024
    cap = budget // max(1, 2 * (K + Cout) * itemsize)   # in + out, double-buffered
    cap = min(cap, 4096, M)
    cap = max(128, (cap // 128) * 128)
    tm = cap
    while M % tm:            # M is a multiple of 128, so this terminates >= 128
        tm -= 128
    return tm


def gemm_bias(w, x_cm, bias, cdtype, vmem_limit):
    """(Cout, K) @ (K, M) + bias[:, None], channel-major, gridded over M."""
    Cout, K = w.shape
    M0 = x_cm.shape[1]
    M = ((M0 + 127) // 128) * 128
    if M != M0:
        x_cm = jnp.pad(x_cm, ((0, 0), (0, M - M0)))
    itemsize = jnp.dtype(cdtype).itemsize
    tm = _pick_tm(M, K, Cout, itemsize)
    bias2 = bias.reshape(Cout, 1).astype(jnp.float32)

    cost = pl.CostEstimate(
        flops=2 * Cout * K * M,
        transcendentals=0,
        bytes_accessed=itemsize * (Cout * K + K * M + Cout * M) + 4 * Cout,
    )
    y = pl.pallas_call(
        _gemm_bias_kernel,
        out_shape=jax.ShapeDtypeStruct((Cout, M), cdtype),
        grid=(M // tm,),
        in_specs=[
            pl.BlockSpec((Cout, K), lambda i: (0, 0)),
            pl.BlockSpec((K, tm), lambda i: (0, i)),
            pl.BlockSpec((Cout, 1), lambda i: (0, 0)),
        ],
        out_specs=pl.BlockSpec((Cout, tm), lambda i: (0, i)),
        compiler_params=pltpu.CompilerParams(
            dimension_semantics=("parallel",),
            vmem_limit_bytes=vmem_limit),
        cost_estimate=cost,
    )(w.astype(cdtype), x_cm.astype(cdtype), bias2)
    return y if M == M0 else y[:, :M0]


# ------------------------------ conv + BN ------------------------------------

def _same_pad(k, d):
    # Exact replica of the custom Conv2d 'same' padding arithmetic.
    p = k + (k - 1) * (d - 1)
    return p // 2 + (p % 2 - 1)


def conv_bn_cm(x_cm, weight, scale, bias, B, H, W, dilation=(1, 1), *,
               cdtype, vmem_limit):
    """Conv2d(stride=1, bias=False, custom 'same' pad) + BatchNorm (inference
    affine) on channel-major activations x_cm of shape (Cin, B*H*W).

    Spatial convs: taps stacked on the contraction axis -> one deep GEMM,
    computing only the valid output pixels."""
    Cout, Cin, kh, kw = weight.shape
    w_scaled = weight * scale.reshape(Cout, 1, 1, 1)         # fold BN scale
    if kh == 1 and kw == 1:
        return gemm_bias(w_scaled.reshape(Cout, Cin), x_cm, bias, cdtype, vmem_limit)

    dh, dw = dilation
    pad_h, pad_w = _same_pad(kh, dh), _same_pad(kw, dw)
    # TODO(synk): only size-preserving (odd kernel/receptive_size) combos are
    # supported; even receptive_size changes spatial size in the torch module too.
    assert 2 * pad_h == (kh - 1) * dh and 2 * pad_w == (kw - 1) * dw

    x4 = x_cm.reshape(Cin, B, H, W)
    xp = jnp.pad(x4, ((0, 0), (0, 0), (pad_h, pad_h), (pad_w, pad_w)))
    # Output-centric K-stacking: tap (i, j) contributes the (H, W) window at
    # offset (i*dh, j*dw) of the padded frame.
    taps = [xp[:, :, i * dh:i * dh + H, j * dw:j * dw + W].reshape(Cin, B * H * W)
            for i in range(kh) for j in range(kw)]
    xk = jnp.concatenate(taps, axis=0)                        # (kh*kw*Cin, M)
    wk = jnp.transpose(w_scaled, (0, 2, 3, 1)).reshape(Cout, kh * kw * Cin)
    return gemm_bias(wk, xk, bias, cdtype, vmem_limit)


# ------------------------------ attention ------------------------------------

def attention_core(q_r, k_r, v_r, cdtype, vmem_limit):
    """softmax(q^T k) applied to v; one batch element per grid step."""
    B, N, A = q_r.shape
    Nv = v_r.shape[1]
    itemsize = jnp.dtype(cdtype).itemsize
    cost = pl.CostEstimate(
        flops=2 * B * A * A * (N + Nv),
        transcendentals=B * A * A,
        bytes_accessed=itemsize * B * (2 * N * A + Nv * A + A * Nv),
    )
    return pl.pallas_call(
        _attn_kernel,
        out_shape=jax.ShapeDtypeStruct((B, A, Nv), cdtype),
        grid=(B,),
        in_specs=[
            pl.BlockSpec((1, N, A), lambda b: (b, 0, 0)),
            pl.BlockSpec((1, N, A), lambda b: (b, 0, 0)),
            pl.BlockSpec((1, Nv, A), lambda b: (b, 0, 0)),
        ],
        out_specs=pl.BlockSpec((1, A, Nv), lambda b: (b, 0, 0)),
        compiler_params=pltpu.CompilerParams(
            dimension_semantics=("parallel",),
            vmem_limit_bytes=vmem_limit),
        cost_estimate=cost,
    )(q_r.astype(cdtype), k_r.astype(cdtype), v_r.astype(cdtype))


def attention_branch(q_cm, k_cm, v_cm, *, axis, B, C, H, W, cdtype, vmem_limit):
    """SelfAttention core (without gamma/residual).  Inputs are channel-major
    slices of the fused q/k/v GEMM output; returns channel-major (C, B*H*W)."""
    M = B * H * W

    def to_bna(a_cm, ch):
        # Row-major reshape replicates torch .view on contiguous NCHW tensors,
        # including the "scrambled" view of the single-axis modes.
        return jnp.transpose(a_cm.reshape(ch, B, H, W), (1, 0, 2, 3)).reshape(B, -1, axis)

    q_r = to_bna(q_cm, q_cm.shape[0])
    k_r = to_bna(k_cm, k_cm.shape[0])
    v_r = to_bna(v_cm, C)
    o_t = attention_core(q_r, k_r, v_r, cdtype, vmem_limit)        # (B, axis, Nv)
    out = jnp.transpose(o_t, (0, 2, 1)).reshape(B, C, H, W)        # torch .view back
    return jnp.transpose(out, (1, 0, 2, 3)).reshape(C, M)          # channel-major


# ------------------------------ full forward ---------------------------------

def paa_kernel_forward(x, p, receptive_size):
    B, Cin, H, W = x.shape
    C = p['conv0_w'].shape[0]
    C8 = C // 8
    M = B * H * W
    r = receptive_size
    cdtype = _COMPUTE_DTYPE
    vlim = _VMEM_LIMIT

    # One NCHW -> channel-major transpose (and cast) at the module boundary.
    x_cm = jnp.transpose(x, (1, 0, 2, 3)).reshape(Cin, M).astype(cdtype)

    conv = functools.partial(conv_bn_cm, B=B, H=H, W=W, cdtype=cdtype, vmem_limit=vlim)
    x_cm = conv(x_cm, p['conv0_w'], p['conv0_s'], p['conv0_b'])
    x_cm = conv(x_cm, p['conv1_w'], p['conv1_s'], p['conv1_b'])
    x_cm = conv(x_cm, p['conv2_w'], p['conv2_s'], p['conv2_b'])

    # Fused q/k/v projections of BOTH attention branches: one lane-dense GEMM
    # with the BN scales folded into the weights.
    Ha, Wa = p['Hattn'], p['Wattn']

    def w2(d, k):
        w = d[k + '_w'] * d[k + '_s'].reshape(-1, 1, 1, 1)
        return w.reshape(w.shape[0], C)

    w_all = jnp.concatenate([w2(Ha, 'q'), w2(Ha, 'k'), w2(Ha, 'v'),
                             w2(Wa, 'q'), w2(Wa, 'k'), w2(Wa, 'v')], axis=0)
    b_all = jnp.concatenate([Ha['q_b'], Ha['k_b'], Ha['v_b'],
                             Wa['q_b'], Wa['k_b'], Wa['v_b']], axis=0)
    qkv_cm = gemm_bias(w_all, x_cm, b_all, cdtype, vlim)     # (2*(2*C8+C), M)

    # Channel-range slices straight off the channel-major qkv (rows contiguous).
    sizes = [C8, C8, C, C8, C8, C]
    offs = [0]
    for s in sizes[:-1]:
        offs.append(offs[-1] + s)
    hq, hk, hv, wq, wk, wv = (qkv_cm[o:o + s] for o, s in zip(offs, sizes))

    branch = functools.partial(attention_branch, B=B, C=C, H=H, W=W,
                               cdtype=cdtype, vmem_limit=vlim)
    out_h = branch(hq, hk, hv, axis=H)
    out_w = branch(wq, wk, wv, axis=W)

    # Hx + Wx = (gamma_h*out_h + x) + (gamma_w*out_w + x); single fused pass.
    y_cm = (Ha['gamma'] * out_h.astype(jnp.float32)
            + Wa['gamma'] * out_w.astype(jnp.float32)
            + 2.0 * x_cm.astype(jnp.float32)).astype(cdtype)

    y_cm = conv(y_cm, p['conv3_w'], p['conv3_s'], p['conv3_b'], dilation=(r, r))
    return jnp.transpose(y_cm.reshape(C, B, H, W), (1, 0, 2, 3)).astype(jnp.float32)


# -------------------------- deterministic params -----------------------------

def _kaiming(key, shape):
    fan_in = shape[1] * shape[2] * shape[3]
    return jax.random.normal(key, shape, jnp.float32) * jnp.sqrt(2.0 / fan_in)


def _bn_params(key, c, eps=1e-5):
    k1, k2 = jax.random.split(key)
    gamma = 1.0 + 0.1 * jax.random.normal(k1, (c,), jnp.float32)
    beta = 0.1 * jax.random.normal(k2, (c,), jnp.float32)
    mean = jnp.zeros((c,), jnp.float32)
    var = jnp.ones((c,), jnp.float32)
    scale = gamma / jnp.sqrt(var + eps)
    bias = beta - mean * scale
    return scale, bias


def init_params(key, in_ch, out_ch, r):
    ks = jax.random.split(key, 20)

    def conv_block(kw_key, kb_key, cin, cout, kh, kwid):
        w = _kaiming(kw_key, (cout, cin, kh, kwid))
        s, b = _bn_params(kb_key, cout)
        return w, s, b

    p = {}
    p['conv0_w'], p['conv0_s'], p['conv0_b'] = conv_block(ks[0], ks[1], in_ch, out_ch, 1, 1)
    p['conv1_w'], p['conv1_s'], p['conv1_b'] = conv_block(ks[2], ks[3], out_ch, out_ch, 1, r)
    p['conv2_w'], p['conv2_s'], p['conv2_b'] = conv_block(ks[4], ks[5], out_ch, out_ch, r, 1)
    p['conv3_w'], p['conv3_s'], p['conv3_b'] = conv_block(ks[6], ks[7], out_ch, out_ch, 3, 3)

    def attn_block(kq, kqb, kk, kkb, kv, kvb):
        d = {}
        d['q_w'], d['q_s'], d['q_b'] = conv_block(kq, kqb, out_ch, out_ch // 8, 1, 1)
        d['k_w'], d['k_s'], d['k_b'] = conv_block(kk, kkb, out_ch, out_ch // 8, 1, 1)
        d['v_w'], d['v_s'], d['v_b'] = conv_block(kv, kvb, out_ch, out_ch, 1, 1)
        # PyTorch initializes gamma to 0 (attention disabled at init); use a
        # deterministic nonzero value so the attention math is exercised.
        d['gamma'] = jnp.float32(0.1)
        return d

    p['Hattn'] = attn_block(*ks[8:14])
    p['Wattn'] = attn_block(*ks[14:20])
    return p


# --------------------------------- main ---------------------------------------

if __name__ == "__main__":
    B, IN_CH, OUT_CH, H, W, R = 2, 16, 16, 16, 16, 3
    key = jax.random.PRNGKey(0)
    kx, kp = jax.random.split(key)
    params = init_params(kp, IN_CH, OUT_CH, R)
    x = jax.random.normal(kx, (B, IN_CH, H, W), jnp.float32)

    fwd = jax.jit(functools.partial(paa_kernel_forward, receptive_size=R))
    y = fwd(x, params)
    jax.block_until_ready(y)

    assert y.shape == (B, OUT_CH, H, W), y.shape
    assert bool(jnp.all(jnp.isfinite(y)))
    print("KERNEL_OK")
</pallas_src>

<mosaic_0001>
module attributes {stable_mosaic.version = 11 : i64} {
  func.func @_gemm_bias_kernel(%arg0: i32, %arg1: memref<16x16xf32, #tpu.memory_space<vmem>>, %arg2: memref<16x512xf32, #tpu.memory_space<vmem>>, %arg3: memref<16x1xf32, #tpu.memory_space<vmem>>, %arg4: memref<16x512xf32, #tpu.memory_space<vmem>>) attributes {dimension_semantics = [#tpu.dimension_semantics<parallel>], iteration_bounds = array<i64: 1>, scalar_prefetch = 0 : i64, scratch_operands = 0 : i64, tpu.core_type = #tpu.core_type<tc>, window_params = [{pipeline_mode = #tpu.pipeline_mode<synchronous>, transform_indices = @transform_0, window_bounds = array<i64: 16, 16>}, {transform_indices = @transform_1, window_bounds = array<i64: 16, 512>}, {pipeline_mode = #tpu.pipeline_mode<synchronous>, transform_indices = @transform_2, window_bounds = array<i64: 16, 1>}, {transform_indices = @transform_3, window_bounds = array<i64: 16, 512>}]} {
    %c0 = arith.constant 0 : index
    %c0_0 = arith.constant 0 : index
    %0 = vector.load %arg1[%c0, %c0_0] : memref<16x16xf32, #tpu.memory_space<vmem>>, vector<16x16xf32>
    %c0_1 = arith.constant 0 : index
    %c0_2 = arith.constant 0 : index
    %1 = vector.load %arg2[%c0_1, %c0_2] : memref<16x512xf32, #tpu.memory_space<vmem>>, vector<16x512xf32>
    %cst = arith.constant dense<0.000000e+00> : vector<16x512xf32>
    %2 = tpu.matmul %0, %1, %cst {dimension_numbers = #tpu.dot_dimension_numbers<[1], [0], [0], [1], [0, 0, 1, 1], [], []>} : vector<16x16xf32>, vector<16x512xf32>, vector<16x512xf32> -> vector<16x512xf32>
    %c0_3 = arith.constant 0 : index
    %c0_4 = arith.constant 0 : index
    %3 = vector.load %arg3[%c0_3, %c0_4] : memref<16x1xf32, #tpu.memory_space<vmem>>, vector<16x1xf32>
    %4 = vector.broadcast %3 : vector<16x1xf32> to vector<16x512xf32>
    %5 = arith.addf %2, %4 : vector<16x512xf32>
    %c0_5 = arith.constant 0 : index
    %c0_6 = arith.constant 0 : index
    %6 = vector.load %arg4[%c0_5, %c0_6] : memref<16x512xf32, #tpu.memory_space<vmem>>, vector<16x512xf32>
    tpu.vector_store %arg4[%c0_5, %c0_6], %5 {strides = array<i32>} : memref<16x512xf32, #tpu.memory_space<vmem>>, vector<16x512xf32>,
    return
  }
  func.func @transform_0(%arg0: i32) -> (i32, i32) {
    %c0_i32 = arith.constant 0 : i32
    %c0_i32_0 = arith.constant 0 : i32
    %c0_i32_1 = arith.constant 0 : i32
    return %c0_i32, %c0_i32_0 : i32, i32
  }
  func.func @transform_1(%arg0: i32) -> (i32, i32) {
    %c0_i32 = arith.constant 0 : i32
    %c0_i32_0 = arith.constant 0 : i32
    return %c0_i32, %arg0 : i32, i32
  }
  func.func @transform_2(%arg0: i32) -> (i32, i32) {
    %c0_i32 = arith.constant 0 : i32
    %c0_i32_0 = arith.constant 0 : i32
    %c0_i32_1 = arith.constant 0 : i32
    return %c0_i32, %c0_i32_0 : i32, i32
  }
  func.func @transform_3(%arg0: i32) -> (i32, i32) {
    %c0_i32 = arith.constant 0 : i32
    %c0_i32_0 = arith.constant 0 : i32
    return %c0_i32, %arg0 : i32, i32
  }
}

module attributes {stable_mosaic.version = 11 : i64} {
  func.func @_gemm_bias_kernel(%arg0: i32, %arg1: memref<16x48xf32, #tpu.memory_space<vmem>>, %arg2: memref<48x512xf32, #tpu.memory_space<vmem>>, %arg3: memref<16x1xf32, #tpu.memory_space<vmem>>, %arg4: memref<16x512xf32, #tpu.memory_space<vmem>>) attributes {dimension_semantics = [#tpu.dimension_semantics<parallel>], iteration_bounds = array<i64: 1>, scalar_prefetch = 0 : i64, scratch_operands = 0 : i64, tpu.core_type = #tpu.core_type<tc>, window_params = [{pipeline_mode = #tpu.pipeline_mode<synchronous>, transform_indices = @transform_0, window_bounds = array<i64: 16, 48>}, {transform_indices = @transform_1, window_bounds = array<i64: 48, 512>}, {pipeline_mode = #tpu.pipeline_mode<synchronous>, transform_indices = @transform_2, window_bounds = array<i64: 16, 1>}, {transform_indices = @transform_3, window_bounds = array<i64: 16, 512>}]} {
    %c0 = arith.constant 0 : index
    %c0_0 = arith.constant 0 : index
    %0 = vector.load %arg1[%c0, %c0_0] : memref<16x48xf32, #tpu.memory_space<vmem>>, vector<16x48xf32>
    %c0_1 = arith.constant 0 : index
    %c0_2 = arith.constant 0 : index
    %1 = vector.load %arg2[%c0_1, %c0_2] : memref<48x512xf32, #tpu.memory_space<vmem>>, vector<48x512xf32>
    %cst = arith.constant dense<0.000000e+00> : vector<16x512xf32>
    %2 = tpu.matmul %0, %1, %cst {dimension_numbers = #tpu.dot_dimension_numbers<[1], [0], [0], [1], [0, 0, 1, 1], [], []>} : vector<16x48xf32>, vector<48x512xf32>, vector<16x512xf32> -> vector<16x512xf32>
    %c0_3 = arith.constant 0 : index
    %c0_4 = arith.constant 0 : index
    %3 = vector.load %arg3[%c0_3, %c0_4] : memref<16x1xf32, #tpu.memory_space<vmem>>, vector<16x1xf32>
    %4 = vector.broadcast %3 : vector<16x1xf32> to vector<16x512xf32>
    %5 = arith.addf %2, %4 : vector<16x512xf32>
    %c0_5 = arith.constant 0 : index
    %c0_6 = arith.constant 0 : index
    %6 = vector.load %arg4[%c0_5, %c0_6] : memref<16x512xf32, #tpu.memory_space<vmem>>, vector<16x512xf32>
    tpu.vector_store %arg4[%c0_5, %c0_6], %5 {strides = array<i32>} : memref<16x512xf32, #tpu.memory_space<vmem>>, vector<16x512xf32>,
    return
  }
  func.func @transform_0(%arg0: i32) -> (i32, i32) {
    %c0_i32 = arith.constant 0 : i32
    %c0_i32_0 = arith.constant 0 : i32
    %c0_i32_1 = arith.constant 0 : i32
    return %c0_i32, %c0_i32_0 : i32, i32
  }
  func.func @transform_1(%arg0: i32) -> (i32, i32) {
    %c0_i32 = arith.constant 0 : i32
    %c0_i32_0 = arith.constant 0 : i32
    return %c0_i32, %arg0 : i32, i32
  }
  func.func @transform_2(%arg0: i32) -> (i32, i32) {
    %c0_i32 = arith.constant 0 : i32
    %c0_i32_0 = arith.constant 0 : i32
    %c0_i32_1 = arith.constant 0 : i32
    return %c0_i32, %c0_i32_0 : i32, i32
  }
  func.func @transform_3(%arg0: i32) -> (i32, i32) {
    %c0_i32 = arith.constant 0 : i32
    %c0_i32_0 = arith.constant 0 : i32
    return %c0_i32, %arg0 : i32, i32
  }
}

module attributes {stable_mosaic.version = 11 : i64} {
  func.func @_gemm_bias_kernel(%arg0: i32, %arg1: memref<40x16xf32, #tpu.memory_space<vmem>>, %arg2: memref<16x512xf32, #tpu.memory_space<vmem>>, %arg3: memref<40x1xf32, #tpu.memory_space<vmem>>, %arg4: memref<40x512xf32, #tpu.memory_space<vmem>>) attributes {dimension_semantics = [#tpu.dimension_semantics<parallel>], iteration_bounds = array<i64: 1>, scalar_prefetch = 0 : i64, scratch_operands = 0 : i64, tpu.core_type = #tpu.core_type<tc>, window_params = [{pipeline_mode = #tpu.pipeline_mode<synchronous>, transform_indices = @transform_0, window_bounds = array<i64: 40, 16>}, {transform_indices = @transform_1, window_bounds = array<i64: 16, 512>}, {pipeline_mode = #tpu.pipeline_mode<synchronous>, transform_indices = @transform_2, window_bounds = array<i64: 40, 1>}, {transform_indices = @transform_3, window_bounds = array<i64: 40, 512>}]} {
    %c0 = arith.constant 0 : index
    %c0_0 = arith.constant 0 : index
    %0 = vector.load %arg1[%c0, %c0_0] : memref<40x16xf32, #tpu.memory_space<vmem>>, vector<40x16xf32>
    %c0_1 = arith.constant 0 : index
    %c0_2 = arith.constant 0 : index
    %1 = vector.load %arg2[%c0_1, %c0_2] : memref<16x512xf32, #tpu.memory_space<vmem>>, vector<16x512xf32>
    %cst = arith.constant dense<0.000000e+00> : vector<40x512xf32>
    %2 = tpu.matmul %0, %1, %cst {dimension_numbers = #tpu.dot_dimension_numbers<[1], [0], [0], [1], [0, 0, 1, 1], [], []>} : vector<40x16xf32>, vector<16x512xf32>, vector<40x512xf32> -> vector<40x512xf32>
    %c0_3 = arith.constant 0 : index
    %c0_4 = arith.constant 0 : index
    %3 = vector.load %arg3[%c0_3, %c0_4] : memref<40x1xf32, #tpu.memory_space<vmem>>, vector<40x1xf32>
    %4 = vector.broadcast %3 : vector<40x1xf32> to vector<40x512xf32>
    %5 = arith.addf %2, %4 : vector<40x512xf32>
    %c0_5 = arith.constant 0 : index
    %c0_6 = arith.constant 0 : index
    %6 = vector.load %arg4[%c0_5, %c0_6] : memref<40x512xf32, #tpu.memory_space<vmem>>, vector<40x512xf32>
    tpu.vector_store %arg4[%c0_5, %c0_6], %5 {strides = array<i32>} : memref<40x512xf32, #tpu.memory_space<vmem>>, vector<40x512xf32>,
    return
  }
  func.func @transform_0(%arg0: i32) -> (i32, i32) {
    %c0_i32 = arith.constant 0 : i32
    %c0_i32_0 = arith.constant 0 : i32
    %c0_i32_1 = arith.constant 0 : i32
    return %c0_i32, %c0_i32_0 : i32, i32
  }
  func.func @transform_1(%arg0: i32) -> (i32, i32) {
    %c0_i32 = arith.constant 0 : i32
    %c0_i32_0 = arith.constant 0 : i32
    return %c0_i32, %arg0 : i32, i32
  }
  func.func @transform_2(%arg0: i32) -> (i32, i32) {
    %c0_i32 = arith.constant 0 : i32
    %c0_i32_0 = arith.constant 0 : i32
    %c0_i32_1 = arith.constant 0 : i32
    return %c0_i32, %c0_i32_0 : i32, i32
  }
  func.func @transform_3(%arg0: i32) -> (i32, i32) {
    %c0_i32 = arith.constant 0 : i32
    %c0_i32_0 = arith.constant 0 : i32
    return %c0_i32, %arg0 : i32, i32
  }
}

module attributes {stable_mosaic.version = 11 : i64} {
  func.func @_attn_kernel(%arg0: i32, %arg1: memref<1x32x16xf32, #tpu.memory_space<vmem>>, %arg2: memref<1x32x16xf32, #tpu.memory_space<vmem>>, %arg3: memref<1x256x16xf32, #tpu.memory_space<vmem>>, %arg4: memref<1x16x256xf32, #tpu.memory_space<vmem>>) attributes {dimension_semantics = [#tpu.dimension_semantics<parallel>], iteration_bounds = array<i64: 2>, scalar_prefetch = 0 : i64, scratch_operands = 0 : i64, tpu.core_type = #tpu.core_type<tc>, window_params = [{transform_indices = @transform_0, window_bounds = array<i64: 1, 32, 16>}, {transform_indices = @transform_1, window_bounds = array<i64: 1, 32, 16>}, {transform_indices = @transform_2, window_bounds = array<i64: 1, 256, 16>}, {transform_indices = @transform_3, window_bounds = array<i64: 1, 16, 256>}]} {
    %c0 = arith.constant 0 : index
    %c0_0 = arith.constant 0 : index
    %c0_1 = arith.constant 0 : index
    %0 = vector.load %arg1[%c0, %c0_0, %c0_1] : memref<1x32x16xf32, #tpu.memory_space<vmem>>, vector<1x32x16xf32>
    %1 = vector.shape_cast %0 : vector<1x32x16xf32> to vector<32x16xf32>
    %c0_2 = arith.constant 0 : index
    %c0_3 = arith.constant 0 : index
    %c0_4 = arith.constant 0 : index
    %2 = vector.load %arg2[%c0_2, %c0_3, %c0_4] : memref<1x32x16xf32, #tpu.memory_space<vmem>>, vector<1x32x16xf32>
    %3 = vector.shape_cast %2 : vector<1x32x16xf32> to vector<32x16xf32>
    %c0_5 = arith.constant 0 : index
    %c0_6 = arith.constant 0 : index
    %c0_7 = arith.constant 0 : index
    %4 = vector.load %arg3[%c0_5, %c0_6, %c0_7] : memref<1x256x16xf32, #tpu.memory_space<vmem>>, vector<1x256x16xf32>
    %5 = vector.shape_cast %4 : vector<1x256x16xf32> to vector<256x16xf32>
    %cst = arith.constant dense<0.000000e+00> : vector<16x16xf32>
    %6 = tpu.matmul %1, %3, %cst {dimension_numbers = #tpu.dot_dimension_numbers<[0], [0], [1], [1], [0, 1, 1, 1], [], []>} : vector<32x16xf32>, vector<32x16xf32>, vector<16x16xf32> -> vector<16x16xf32>
    %cst_8 = arith.constant dense<0xFF800000> : vector<16xf32>
    %7 = vector.multi_reduction <maximumf>, %6, %cst_8 [1] : vector<16x16xf32> to vector<16xf32>
    %8 = vector.shape_cast %7 : vector<16xf32> to vector<16x1xf32>
    %9 = vector.broadcast %8 : vector<16x1xf32> to vector<16x16xf32>
    %10 = arith.subf %6, %9 : vector<16x16xf32>
    %11 = math.exp %10 : vector<16x16xf32>
    %cst_9 = arith.constant dense<0.000000e+00> : vector<16xf32>
    %12 = vector.multi_reduction <add>, %11, %cst_9 [1] : vector<16x16xf32> to vector<16xf32>
    %13 = vector.shape_cast %12 : vector<16xf32> to vector<16x1xf32>
    %14 = vector.broadcast %13 : vector<16x1xf32> to vector<16x16xf32>
    %15 = arith.divf %11, %14 : vector<16x16xf32>
    %cst_10 = arith.constant dense<0.000000e+00> : vector<16x256xf32>
    %16 = tpu.matmul %15, %5, %cst_10 {dimension_numbers = #tpu.dot_dimension_numbers<[1], [1], [0], [0], [0, 0, 1, 0], [], []>} : vector<16x16xf32>, vector<256x16xf32>, vector<16x256xf32> -> vector<16x256xf32>
    %c0_11 = arith.constant 0 : index
    %c0_12 = arith.constant 0 : index
    %c0_13 = arith.constant 0 : index
    %17 = vector.load %arg4[%c0_11, %c0_12, %c0_13] : memref<1x16x256xf32, #tpu.memory_space<vmem>>, vector<1x16x256xf32>
    %18 = vector.shape_cast %17 : vector<1x16x256xf32> to vector<16x256xf32>
    %19 = vector.shape_cast %16 : vector<16x256xf32> to vector<1x16x256xf32>
    tpu.vector_store %arg4[%c0_11, %c0_12, %c0_13], %19 {strides = array<i32>} : memref<1x16x256xf32, #tpu.memory_space<vmem>>, vector<1x16x256xf32>,
    return
  }
  func.func @transform_0(%arg0: i32) -> (i32, i32, i32) {
    %c0_i32 = arith.constant 0 : i32
    %c0_i32_0 = arith.constant 0 : i32
    %c0_i32_1 = arith.constant 0 : i32
    return %arg0, %c0_i32, %c0_i32_0 : i32, i32, i32
  }
  func.func @transform_1(%arg0: i32) -> (i32, i32, i32) {
    %c0_i32 = arith.constant 0 : i32
    %c0_i32_0 = arith.constant 0 : i32
    %c0_i32_1 = arith.constant 0 : i32
    return %arg0, %c0_i32, %c0_i32_0 : i32, i32, i32
  }
  func.func @transform_2(%arg0: i32) -> (i32, i32, i32) {
    %c0_i32 = arith.constant 0 : i32
    %c0_i32_0 = arith.constant 0 : i32
    %c0_i32_1 = arith.constant 0 : i32
    return %arg0, %c0_i32, %c0_i32_0 : i32, i32, i32
  }
  func.func @transform_3(%arg0: i32) -> (i32, i32, i32) {
    %c0_i32 = arith.constant 0 : i32
    %c0_i32_0 = arith.constant 0 : i32
    %c0_i32_1 = arith.constant 0 : i32
    return %arg0, %c0_i32, %c0_i32_0 : i32, i32, i32
  }
}

module attributes {stable_mosaic.version = 11 : i64} {
  func.func @_gemm_bias_kernel(%arg0: i32, %arg1: memref<16x144xf32, #tpu.memory_space<vmem>>, %arg2: memref<144x512xf32, #tpu.memory_space<vmem>>, %arg3: memref<16x1xf32, #tpu.memory_space<vmem>>, %arg4: memref<16x512xf32, #tpu.memory_space<vmem>>) attributes {dimension_semantics = [#tpu.dimension_semantics<parallel>], iteration_bounds = array<i64: 1>, scalar_prefetch = 0 : i64, scratch_operands = 0 : i64, tpu.core_type = #tpu.core_type<tc>, window_params = [{pipeline_mode = #tpu.pipeline_mode<synchronous>, transform_indices = @transform_0, window_bounds = array<i64: 16, 144>}, {transform_indices = @transform_1, window_bounds = array<i64: 144, 512>}, {pipeline_mode = #tpu.pipeline_mode<synchronous>, transform_indices = @transform_2, window_bounds = array<i64: 16, 1>}, {transform_indices = @transform_3, window_bounds = array<i64: 16, 512>}]} {
    %c0 = arith.constant 0 : index
    %c0_0 = arith.constant 0 : index
    %0 = vector.load %arg1[%c0, %c0_0] : memref<16x144xf32, #tpu.memory_space<vmem>>, vector<16x144xf32>
    %c0_1 = arith.constant 0 : index
    %c0_2 = arith.constant 0 : index
    %1 = vector.load %arg2[%c0_1, %c0_2] : memref<144x512xf32, #tpu.memory_space<vmem>>, vector<144x512xf32>
    %cst = arith.constant dense<0.000000e+00> : vector<16x512xf32>
    %2 = tpu.matmul %0, %1, %cst {dimension_numbers = #tpu.dot_dimension_numbers<[1], [0], [0], [1], [0, 0, 1, 1], [], []>} : vector<16x144xf32>, vector<144x512xf32>, vector<16x512xf32> -> vector<16x512xf32>
    %c0_3 = arith.constant 0 : index
    %c0_4 = arith.constant 0 : index
    %3 = vector.load %arg3[%c0_3, %c0_4] : memref<16x1xf32, #tpu.memory_space<vmem>>, vector<16x1xf32>
    %4 = vector.broadcast %3 : vector<16x1xf32> to vector<16x512xf32>
    %5 = arith.addf %2, %4 : vector<16x512xf32>
    %c0_5 = arith.constant 0 : index
    %c0_6 = arith.constant 0 : index
    %6 = vector.load %arg4[%c0_5, %c0_6] : memref<16x512xf32, #tpu.memory_space<vmem>>, vector<16x512xf32>
    tpu.vector_store %arg4[%c0_5, %c0_6], %5 {strides = array<i32>} : memref<16x512xf32, #tpu.memory_space<vmem>>, vector<16x512xf32>,
    return
  }
  func.func @transform_0(%arg0: i32) -> (i32, i32) {
    %c0_i32 = arith.constant 0 : i32
    %c0_i32_0 = arith.constant 0 : i32
    %c0_i32_1 = arith.constant 0 : i32
    return %c0_i32, %c0_i32_0 : i32, i32
  }
  func.func @transform_1(%arg0: i32) -> (i32, i32) {
    %c0_i32 = arith.constant 0 : i32
    %c0_i32_0 = arith.constant 0 : i32
    return %c0_i32, %arg0 : i32, i32
  }
  func.func @transform_2(%arg0: i32) -> (i32, i32) {
    %c0_i32 = arith.constant 0 : i32
    %c0_i32_0 = arith.constant 0 : i32
    %c0_i32_1 = arith.constant 0 : i32
    return %c0_i32, %c0_i32_0 : i32, i32
  }
  func.func @transform_3(%arg0: i32) -> (i32, i32) {
    %c0_i32 = arith.constant 0 : i32
    %c0_i32_0 = arith.constant 0 : i32
    return %c0_i32, %arg0 : i32, i32
  }
}

</mosaic_0001>

<llo_original>
// kernel: paa_kernel_forward.7
$region0: #{paa_kernel_forward.7}
  #allocation0 [shape = 'u32[]', space=smem, size = 0x4, offset = 0x4, fixed_abs, tag = 'smem constant byte address 0x4 - core index']
  #allocation1 [shape = 'u32[144,128]{1,0:T(1,128)}', space=vmem, size = 0x12000, scoped, tag = 'internal scratch']
  %s0 = inlined_call_operand.vmem [shape: f32[16,16], index: 0, kind: input, shape index: {}]
  %s1 = inlined_call_operand.vmem [shape: f32[16,512], index: 1, kind: input, shape index: {}]
  %s2 = inlined_call_operand.vmem [shape: f32[16,1], index: 2, kind: input, shape index: {}]
  %s3 = inlined_call_operand.vmem [shape: f32[16,512], index: 3, kind: output, shape index: {}]
  %s4 = sld [smem:[#allocation0]]
  $region22: #{paa_kernel_forward.7} parent=0
    _
  %s6 = ssub.s32 1, %s4
  %s7 = scalar_select 0, %s6, %s4
  // Predicated region
  $region2: #{paa_kernel_forward.7} parent=0 // pred_check
    _
  $region3: #{paa_kernel_forward.7} parent=0 // pred_check_branch
    %9 = sbr.rel (0) target = $region5
  $region4: #{paa_kernel_forward.7} parent=0 // pred_region
    _
  $region5: #{paa_kernel_forward.7} parent=0 // pred_fallthru
    _
  // Predicated region
  $region6: #{paa_kernel_forward.7} parent=0 // pred_check
    _
  $region7: #{paa_kernel_forward.7} parent=0 // pred_check_branch
    %11 = sbr.rel (0) target = $region9
  $region8: #{paa_kernel_forward.7} parent=0 // pred_region
    _
  $region9: #{paa_kernel_forward.7} parent=0 // pred_fallthru
    _
  // Predicated region
  $region10: #{paa_kernel_forward.7} parent=0 // pred_check
    _
  $region11: #{paa_kernel_forward.7} parent=0 // pred_check_branch
    %13 = sbr.rel (0) target = $region13
  $region12: #{paa_kernel_forward.7} parent=0 // pred_region
    _
  $region13: #{paa_kernel_forward.7} parent=0 // pred_fallthru
    _
  %v14 = vld [vmem:[%s0] sm:$0xff]
  %v15 = vld [vmem:[%s0 + $0x8] sm:$0xff]
  %v16 = vld [vmem:[%s1] sm:$0xff]
  %v17 = vld [vmem:[%s1 + $0x8] sm:$0xff]
  %v18 = vld [vmem:[%s1 + $0x10] sm:$0xff]
  %v19 = vld [vmem:[%s1 + $0x18] sm:$0xff]
  %v20 = vld [vmem:[%s1 + $0x20] sm:$0xff]
  %v21 = vld [vmem:[%s1 + $0x28] sm:$0xff]
  %v22 = vld [vmem:[%s1 + $0x30] sm:$0xff]
  %v23 = vld [vmem:[%s1 + $0x38] sm:$0xff]
  %v24 = vld [vmem:[%s2] sm:$0xff]
  %v25 = vld [vmem:[%s2 + $0x8] sm:$0xff]
  %27 = vset.pattern.permute.xlu0 0
  %28 = vperm.xlu0 %27, %v24
  %v29 = vpop.permute.xlu0 %28
  %32 = vset.pattern.permute.xlu0 0
  %33 = vperm.xlu0 %32, %v25
  %v34 = vpop.permute.xlu0 %33
  %vm36 = vcmask 130048
  %v38 = vsel %vm36, %v14, 0
  %v41 = vsel %vm36, %v15, 0
  %43 = vmatprep.subr.mxu0 0.0
  %44 = vmatpush1.msra.mxu0 0.0
  %45 = vmatprep.subr.mxu0 0.0
  %46 = vmatpush1.msra.mxu0 0.0
  %47 = vmatprep.subr.mxu0 0.0
  %48 = vmatpush1.msra.mxu0 0.0
  %49 = vmatprep.subr.mxu0 0.0
  %50 = vmatpush1.msra.mxu0 0.0
  %51 = vmatprep.subr.mxu0 0.0
  %52 = vmatpush1.msra.mxu0 0.0
  %53 = vmatprep.subr.mxu0 0.0
  %54 = vmatpush1.msra.mxu0 0.0
  %55 = vmatprep.subr.mxu0 0.0
  %56 = vmatpush1.msra.mxu0 0.0
  %57 = vmatprep.subr.mxu0 0.0
  %58 = vmatpush1.msra.mxu0 0.0
  %59 = vmatprep.subr.mxu0 0.0
  %60 = vmatpush1.msra.mxu0 0.0
  %61 = vmatprep.subr.mxu0 0.0
  %62 = vmatpush1.msra.mxu0 0.0
  %63 = vmatprep.subr.mxu0 0.0
  %64 = vmatpush1.msra.mxu0 0.0
  %65 = vmatprep.subr.mxu0 0.0
  %66 = vmatpush1.msra.mxu0 0.0
  %67 = vmatprep.subr.mxu0 0.0
  %68 = vmatpush1.msra.mxu0 0.0
  %69 = vmatprep.subr.mxu0 0.0
  %70 = vmatpush1.msra.mxu0 0.0
  %71 = vmatprep.subr.mxu0 %v21
  %72 = vmatpush1.msra.mxu0 %v20
  %73 = vmatprep.subr.mxu0 %v17
  %74 = vmatpush1.msra.mxu0 %v16
  %75 = vmatprep.subr.mxu0 0.0
  %76 = vmatpush2.msra.mxu0 0.0
  %77 = vmatprep.subr.mxu0 0.0
  %78 = vmatpush2.msra.mxu0 0.0
  %79 = vmatprep.subr.mxu0 0.0
  %80 = vmatpush2.msra.mxu0 0.0
  %81 = vmatprep.subr.mxu0 0.0
  %82 = vmatpush2.msra.mxu0 0.0
  %83 = vmatprep.subr.mxu0 0.0
  %84 = vmatpush2.msra.mxu0 0.0
  %85 = vmatprep.subr.mxu0 0.0
  %86 = vmatpush2.msra.mxu0 0.0
  %87 = vmatprep.subr.mxu0 0.0
  %88 = vmatpush2.msra.mxu0 0.0
  %89 = vmatprep.subr.mxu0 0.0
  %90 = vmatpush2.msra.mxu0 0.0
  %91 = vmatprep.subr.mxu0 0.0
  %92 = vmatpush2.msra.mxu0 0.0
  %93 = vmatprep.subr.mxu0 0.0
  %94 = vmatpush2.msra.mxu0 0.0
  %95 = vmatprep.subr.mxu0 0.0
  %96 = vmatpush2.msra.mxu0 0.0
  %97 = vmatprep.subr.mxu0 0.0
  %98 = vmatpush2.msra.mxu0 0.0
  %99 = vmatprep.subr.mxu0 0.0
  %100 = vmatpush2.msra.mxu0 0.0
  %101 = vmatprep.subr.mxu0 0.0
  %102 = vmatpush2.msra.mxu0 0.0
  %103 = vmatprep.subr.mxu0 0.0
  %104 = vmatpush2.msra.mxu0 0.0
  %105 = vmatprep.subr.mxu0 0.0
  %106 = vmatpush2.msra.mxu0 0.0
  %107 = vmatprep.mubr.f32.mxu0 0.0
  %108 = vmatmul.mubr.f32.gmra.mxu0 %v38
  %v109 = vpop.f32.mrf.mxu0
  %v110 = vadd.f32 %v29, %v109
  %v111 = vpop.f32.mrf.mxu0
  %v112 = vadd.f32 %v29, %v111
  %113 = vmatprep.mubr.f32.mxu0 0.0
  %114 = vmatmul.mubr.f32.gmra.mxu0 %v41
  %v115 = vpop.f32.mrf.mxu0
  %v116 = vadd.f32 %v34, %v115
  %v117 = vpop.f32.mrf.mxu0
  %v118 = vadd.f32 %v34, %v117
  %119 = vdwg.mxu0
  %120 = vmatprep.subr.mxu0 0.0
  %121 = vmatpush1.msra.mxu0 0.0
  %122 = vmatprep.subr.mxu0 0.0
  %123 = vmatpush1.msra.mxu0 0.0
  %124 = vmatprep.subr.mxu0 0.0
  %125 = vmatpush1.msra.mxu0 0.0
  %126 = vmatprep.subr.mxu0 0.0
  %127 = vmatpush1.msra.mxu0 0.0
  %128 = vmatprep.subr.mxu0 0.0
  %129 = vmatpush1.msra.mxu0 0.0
  %130 = vmatprep.subr.mxu0 0.0
  %131 = vmatpush1.msra.mxu0 0.0
  %132 = vmatprep.subr.mxu0 0.0
  %133 = vmatpush1.msra.mxu0 0.0
  %134 = vmatprep.subr.mxu0 0.0
  %135 = vmatpush1.msra.mxu0 0.0
  %136 = vmatprep.subr.mxu0 0.0
  %137 = vmatpush1.msra.mxu0 0.0
  %138 = vmatprep.subr.mxu0 0.0
  %139 = vmatpush1.msra.mxu0 0.0
  %140 = vmatprep.subr.mxu0 0.0
  %141 = vmatpush1.msra.mxu0 0.0
  %142 = vmatprep.subr.mxu0 0.0
  %143 = vmatpush1.msra.mxu0 0.0
  %144 = vmatprep.subr.mxu0 0.0
  %145 = vmatpush1.msra.mxu0 0.0
  %146 = vmatprep.subr.mxu0 0.0
  %147 = vmatpush1.msra.mxu0 0.0
  %148 = vmatprep.subr.mxu0 %v23
  %149 = vmatpush1.msra.mxu0 %v22
  %150 = vmatprep.subr.mxu0 %v19
  %151 = vmatpush1.msra.mxu0 %v18
  %152 = vmatprep.subr.mxu0 0.0
  %153 = vmatpush2.msra.mxu0 0.0
  %154 = vmatprep.subr.mxu0 0.0
  %155 = vmatpush2.msra.mxu0 0.0
  %156 = vmatprep.subr.mxu0 0.0
  %157 = vmatpush2.msra.mxu0 0.0
  %158 = vmatprep.subr.mxu0 0.0
  %159 = vmatpush2.msra.mxu0 0.0
  %160 = vmatprep.subr.mxu0 0.0
  %161 = vmatpush2.msra.mxu0 0.0
  %162 = vmatprep.subr.mxu0 0.0
  %163 = vmatpush2.msra.mxu0 0.0
  %164 = vmatprep.subr.mxu0 0.0
  %165 = vmatpush2.msra.mxu0 0.0
  %166 = vmatprep.subr.mxu0 0.0
  %167 = vmatpush2.msra.mxu0 0.0
  %168 = vmatprep.subr.mxu0 0.0
  %169 = vmatpush2.msra.mxu0 0.0
  %170 = vmatprep.subr.mxu0 0.0
  %171 = vmatpush2.msra.mxu0 0.0
  %172 = vmatprep.subr.mxu0 0.0
  %173 = vmatpush2.msra.mxu0 0.0
  %174 = vmatprep.subr.mxu0 0.0
  %175 = vmatpush2.msra.mxu0 0.0
  %176 = vmatprep.subr.mxu0 0.0
  %177 = vmatpush2.msra.mxu0 0.0
  %178 = vmatprep.subr.mxu0 0.0
  %179 = vmatpush2.msra.mxu0 0.0
  %180 = vmatprep.subr.mxu0 0.0
  %181 = vmatpush2.msra.mxu0 0.0
  %182 = vmatprep.subr.mxu0 0.0
  %183 = vmatpush2.msra.mxu0 0.0
  %184 = vmatprep.mubr.f32.mxu0 0.0
  %185 = vmatmul.mubr.f32.gmra.mxu0 %v38
  %v186 = vpop.f32.mrf.mxu0
  %v187 = vadd.f32 %v29, %v186
  %v188 = vpop.f32.mrf.mxu0
  %v189 = vadd.f32 %v29, %v188
  %190 = vmatprep.mubr.f32.mxu0 0.0
  %191 = vmatmul.mubr.f32.gmra.mxu0 %v41
  %v192 = vpop.f32.mrf.mxu0
  %v193 = vadd.f32 %v34, %v192
  %v194 = vpop.f32.mrf.mxu0
  %v195 = vadd.f32 %v34, %v194
  %196 = vdwg.mxu0
  %197 = vst [vmem:[%s3] sm:$0xff] %v110
  %198 = vst [vmem:[%s3 + $0x8] sm:$0xff] %v112
  %199 = vst [vmem:[%s3 + $0x10] sm:$0xff] %v187
  %200 = vst [vmem:[%s3 + $0x18] sm:$0xff] %v189
  %201 = vst [vmem:[%s3 + $0x20] sm:$0xff] %v116
  %202 = vst [vmem:[%s3 + $0x28] sm:$0xff] %v118
  %203 = vst [vmem:[%s3 + $0x30] sm:$0xff] %v193
  %204 = vst [vmem:[%s3 + $0x38] sm:$0xff] %v195
  // Predicated region
  $region14: #{paa_kernel_forward.7} parent=0 // pred_check
    _
  $region15: #{paa_kernel_forward.7} parent=0 // pred_check_branch
    %206 = sbr.rel (0) target = $region17
  $region16: #{paa_kernel_forward.7} parent=0 // pred_region
    _
  $region17: #{paa_kernel_forward.7} parent=0 // pred_fallthru
    _
  // Predicated region
  $region18: #{paa_kernel_forward.7} parent=0 // pred_check
    _
  $region19: #{paa_kernel_forward.7} parent=0 // pred_check_branch
    %208 = sbr.rel (0) target = $region21
  $region20: #{paa_kernel_forward.7} parent=0 // pred_region
    _
  $region21: #{paa_kernel_forward.7} parent=0 // pred_fallthru
    _

// kernel: paa_kernel_forward.8
$region0: #{paa_kernel_forward.8}
  #allocation0 [shape = 'u32[]', space=smem, size = 0x4, offset = 0x4, fixed_abs, tag = 'smem constant byte address 0x4 - core index']
  #allocation1 [shape = 'u32[144,128]{1,0:T(1,128)}', space=vmem, size = 0x12000, scoped, tag = 'internal scratch']
  %s0 = inlined_call_operand.vmem [shape: f32[16,48], index: 0, kind: input, shape index: {}]
  %s1 = inlined_call_operand.vmem [shape: f32[48,512], index: 1, kind: input, shape index: {}]
  %s2 = inlined_call_operand.vmem [shape: f32[16,1], index: 2, kind: input, shape index: {}]
  %s3 = inlined_call_operand.vmem [shape: f32[16,512], index: 3, kind: output, shape index: {}]
  %s4 = sld [smem:[#allocation0]]
  $region22: #{paa_kernel_forward.8} parent=0
    _
  %s6 = ssub.s32 1, %s4
  %s7 = scalar_select 0, %s6, %s4
  // Predicated region
  $region2: #{paa_kernel_forward.8} parent=0 // pred_check
    _
  $region3: #{paa_kernel_forward.8} parent=0 // pred_check_branch
    %9 = sbr.rel (0) target = $region5
  $region4: #{paa_kernel_forward.8} parent=0 // pred_region
    _
  $region5: #{paa_kernel_forward.8} parent=0 // pred_fallthru
    _
  // Predicated region
  $region6: #{paa_kernel_forward.8} parent=0 // pred_check
    _
  $region7: #{paa_kernel_forward.8} parent=0 // pred_check_branch
    %11 = sbr.rel (0) target = $region9
  $region8: #{paa_kernel_forward.8} parent=0 // pred_region
    _
  $region9: #{paa_kernel_forward.8} parent=0 // pred_fallthru
    _
  // Predicated region
  $region10: #{paa_kernel_forward.8} parent=0 // pred_check
    _
  $region11: #{paa_kernel_forward.8} parent=0 // pred_check_branch
    %13 = sbr.rel (0) target = $region13
  $region12: #{paa_kernel_forward.8} parent=0 // pred_region
    _
  $region13: #{paa_kernel_forward.8} parent=0 // pred_fallthru
    _
  %v14 = vld [vmem:[%s0] sm:$0xff]
  %v15 = vld [vmem:[%s0 + $0x8] sm:$0xff]
  %v16 = vld [vmem:[%s1] sm:$0xff]
  %v17 = vld [vmem:[%s1 + $0x8] sm:$0xff]
  %v18 = vld [vmem:[%s1 + $0x10] sm:$0xff]
  %v19 = vld [vmem:[%s1 + $0x18] sm:$0xff]
  %v20 = vld [vmem:[%s1 + $0x20] sm:$0xff]
  %v21 = vld [vmem:[%s1 + $0x28] sm:$0xff]
  %v22 = vld [vmem:[%s1 + $0x30] sm:$0xff]
  %v23 = vld [vmem:[%s1 + $0x38] sm:$0xff]
  %v24 = vld [vmem:[%s1 + $0x40] sm:$0xff]
  %v25 = vld [vmem:[%s1 + $0x48] sm:$0xff]
  %v26 = vld [vmem:[%s1 + $0x50] sm:$0xff]
  %v27 = vld [vmem:[%s1 + $0x58] sm:$0xff]
  %v28 = vld [vmem:[%s1 + $0x60] sm:$0xff]
  %v29 = vld [vmem:[%s1 + $0x68] sm:$0xff]
  %v30 = vld [vmem:[%s1 + $0x70] sm:$0xff]
  %v31 = vld [vmem:[%s1 + $0x78] sm:$0xff]
  %v32 = vld [vmem:[%s1 + $0x80] sm:$0xff]
  %v33 = vld [vmem:[%s1 + $0x88] sm:$0xff]
  %v34 = vld [vmem:[%s1 + $0x90] sm:$0xff]
  %v35 = vld [vmem:[%s1 + $0x98] sm:$0xff]
  %v36 = vld [vmem:[%s1 + $0xa0] sm:$0xff]
  %v37 = vld [vmem:[%s1 + $0xa8] sm:$0xff]
  %v38 = vld [vmem:[%s1 + $0xb0] sm:$0xff]
  %v39 = vld [vmem:[%s1 + $0xb8] sm:$0xff]
  %v40 = vld [vmem:[%s2] sm:$0xff]
  %v41 = vld [vmem:[%s2 + $0x8] sm:$0xff]
  %43 = vset.pattern.permute.xlu0 0
  %44 = vperm.xlu0 %43, %v40
  %v45 = vpop.permute.xlu0 %44
  %48 = vset.pattern.permute.xlu0 0
  %49 = vperm.xlu0 %48, %v41
  %v50 = vpop.permute.xlu0 %49
  %vm52 = vcmask 392192
  %v54 = vsel %vm52, %v14, 0
  %v57 = vsel %vm52, %v15, 0
  %59 = vmatprep.subr.mxu0 0.0
  %60 = vmatpush1.msra.mxu0 0.0
  %61 = vmatprep.subr.mxu0 0.0
  %62 = vmatpush1.msra.mxu0 0.0
  %63 = vmatprep.subr.mxu0 0.0
  %64 = vmatpush1.msra.mxu0 0.0
  %65 = vmatprep.subr.mxu0 0.0
  %66 = vmatpush1.msra.mxu0 0.0
  %67 = vmatprep.subr.mxu0 0.0
  %68 = vmatpush1.msra.mxu0 0.0
  %69 = vmatprep.subr.mxu0 0.0
  %70 = vmatpush1.msra.mxu0 0.0
  %71 = vmatprep.subr.mxu0 0.0
  %72 = vmatpush1.msra.mxu0 0.0
  %73 = vmatprep.subr.mxu0 0.0
  %74 = vmatpush1.msra.mxu0 0.0
  %75 = vmatprep.subr.mxu0 0.0
  %76 = vmatpush1.msra.mxu0 0.0
  %77 = vmatprep.subr.mxu0 0.0
  %78 = vmatpush1.msra.mxu0 0.0
  %79 = vmatprep.subr.mxu0 %v37
  %80 = vmatpush1.msra.mxu0 %v36
  %81 = vmatprep.subr.mxu0 %v33
  %82 = vmatpush1.msra.mxu0 %v32
  %83 = vmatprep.subr.mxu0 %v29
  %84 = vmatpush1.msra.mxu0 %v28
  %85 = vmatprep.subr.mxu0 %v25
  %86 = vmatpush1.msra.mxu0 %v24
  %87 = vmatprep.subr.mxu0 %v21
  %88 = vmatpush1.msra.mxu0 %v20
  %89 = vmatprep.subr.mxu0 %v17
  %90 = vmatpush1.msra.mxu0 %v16
  %91 = vmatprep.subr.mxu0 0.0
  %92 = vmatpush2.msra.mxu0 0.0
  %93 = vmatprep.subr.mxu0 0.0
  %94 = vmatpush2.msra.mxu0 0.0
  %95 = vmatprep.subr.mxu0 0.0
  %96 = vmatpush2.msra.mxu0 0.0
  %97 = vmatprep.subr.mxu0 0.0
  %98 = vmatpush2.msra.mxu0 0.0
  %99 = vmatprep.subr.mxu0 0.0
  %100 = vmatpush2.msra.mxu0 0.0
  %101 = vmatprep.subr.mxu0 0.0
  %102 = vmatpush2.msra.mxu0 0.0
  %103 = vmatprep.subr.mxu0 0.0
  %104 = vmatpush2.msra.mxu0 0.0
  %105 = vmatprep.subr.mxu0 0.0
  %106 = vmatpush2.msra.mxu0 0.0
  %107 = vmatprep.subr.mxu0 0.0
  %108 = vmatpush2.msra.mxu0 0.0
  %109 = vmatprep.subr.mxu0 0.0
  %110 = vmatpush2.msra.mxu0 0.0
  %111 = vmatprep.subr.mxu0 0.0
  %112 = vmatpush2.msra.mxu0 0.0
  %113 = vmatprep.subr.mxu0 0.0
  %114 = vmatpush2.msra.mxu0 0.0
  %115 = vmatprep.subr.mxu0 0.0
  %116 = vmatpush2.msra.mxu0 0.0
  %117 = vmatprep.subr.mxu0 0.0
  %118 = vmatpush2.msra.mxu0 0.0
  %119 = vmatprep.subr.mxu0 0.0
  %120 = vmatpush2.msra.mxu0 0.0
  %121 = vmatprep.subr.mxu0 0.0
  %122 = vmatpush2.msra.mxu0 0.0
  %123 = vmatprep.mubr.f32.mxu0 0.0
  %124 = vmatmul.mubr.f32.gmra.mxu0 %v54
  %v125 = vpop.f32.mrf.mxu0
  %v126 = vadd.f32 %v45, %v125
  %v127 = vpop.f32.mrf.mxu0
  %v128 = vadd.f32 %v45, %v127
  %129 = vmatprep.mubr.f32.mxu0 0.0
  %130 = vmatmul.mubr.f32.gmra.mxu0 %v57
  %v131 = vpop.f32.mrf.mxu0
  %v132 = vadd.f32 %v50, %v131
  %v133 = vpop.f32.mrf.mxu0
  %v134 = vadd.f32 %v50, %v133
  %135 = vdwg.mxu0
  %136 = vmatprep.subr.mxu0 0.0
  %137 = vmatpush1.msra.mxu0 0.0
  %138 = vmatprep.subr.mxu0 0.0
  %139 = vmatpush1.msra.mxu0 0.0
  %140 = vmatprep.subr.mxu0 0.0
  %141 = vmatpush1.msra.mxu0 0.0
  %142 = vmatprep.subr.mxu0 0.0
  %143 = vmatpush1.msra.mxu0 0.0
  %144 = vmatprep.subr.mxu0 0.0
  %145 = vmatpush1.msra.mxu0 0.0
  %146 = vmatprep.subr.mxu0 0.0
  %147 = vmatpush1.msra.mxu0 0.0
  %148 = vmatprep.subr.mxu0 0.0
  %149 = vmatpush1.msra.mxu0 0.0
  %150 = vmatprep.subr.mxu0 0.0
  %151 = vmatpush1.msra.mxu0 0.0
  %152 = vmatprep.subr.mxu0 0.0
  %153 = vmatpush1.msra.mxu0 0.0
  %154 = vmatprep.subr.mxu0 0.0
  %155 = vmatpush1.msra.mxu0 0.0
  %156 = vmatprep.subr.mxu0 %v39
  %157 = vmatpush1.msra.mxu0 %v38
  %158 = vmatprep.subr.mxu0 %v35
  %159 = vmatpush1.msra.mxu0 %v34
  %160 = vmatprep.subr.mxu0 %v31
  %161 = vmatpush1.msra.mxu0 %v30
  %162 = vmatprep.subr.mxu0 %v27
  %163 = vmatpush1.msra.mxu0 %v26
  %164 = vmatprep.subr.mxu0 %v23
  %165 = vmatpush1.msra.mxu0 %v22
  %166 = vmatprep.subr.mxu0 %v19
  %167 = vmatpush1.msra.mxu0 %v18
  %168 = vmatprep.subr.mxu0 0.0
  %169 = vmatpush2.msra.mxu0 0.0
  %170 = vmatprep.subr.mxu0 0.0
  %171 = vmatpush2.msra.mxu0 0.0
  %172 = vmatprep.subr.mxu0 0.0
  %173 = vmatpush2.msra.mxu0 0.0
  %174 = vmatprep.subr.mxu0 0.0
  %175 = vmatpush2.msra.mxu0 0.0
  %176 = vmatprep.subr.mxu0 0.0
  %177 = vmatpush2.msra.mxu0 0.0
  %178 = vmatprep.subr.mxu0 0.0
  %179 = vmatpush2.msra.mxu0 0.0
  %180 = vmatprep.subr.mxu0 0.0
  %181 = vmatpush2.msra.mxu0 0.0
  %182 = vmatprep.subr.mxu0 0.0
  %183 = vmatpush2.msra.mxu0 0.0
  %184 = vmatprep.subr.mxu0 0.0
  %185 = vmatpush2.msra.mxu0 0.0
  %186 = vmatprep.subr.mxu0 0.0
  %187 = vmatpush2.msra.mxu0 0.0
  %188 = vmatprep.subr.mxu0 0.0
  %189 = vmatpush2.msra.mxu0 0.0
  %190 = vmatprep.subr.mxu0 0.0
  %191 = vmatpush2.msra.mxu0 0.0
  %192 = vmatprep.subr.mxu0 0.0
  %193 = vmatpush2.msra.mxu0 0.0
  %194 = vmatprep.subr.mxu0 0.0
  %195 = vmatpush2.msra.mxu0 0.0
  %196 = vmatprep.subr.mxu0 0.0
  %197 = vmatpush2.msra.mxu0 0.0
  %198 = vmatprep.subr.mxu0 0.0
  %199 = vmatpush2.msra.mxu0 0.0
  %200 = vmatprep.mubr.f32.mxu0 0.0
  %201 = vmatmul.mubr.f32.gmra.mxu0 %v54
  %v202 = vpop.f32.mrf.mxu0
  %v203 = vadd.f32 %v45, %v202
  %v204 = vpop.f32.mrf.mxu0
  %v205 = vadd.f32 %v45, %v204
  %206 = vmatprep.mubr.f32.mxu0 0.0
  %207 = vmatmul.mubr.f32.gmra.mxu0 %v57
  %v208 = vpop.f32.mrf.mxu0
  %v209 = vadd.f32 %v50, %v208
  %v210 = vpop.f32.mrf.mxu0
  %v211 = vadd.f32 %v50, %v210
  %212 = vdwg.mxu0
  %213 = vst [vmem:[%s3] sm:$0xff] %v126
  %214 = vst [vmem:[%s3 + $0x8] sm:$0xff] %v128
  %215 = vst [vmem:[%s3 + $0x10] sm:$0xff] %v203
  %216 = vst [vmem:[%s3 + $0x18] sm:$0xff] %v205
  %217 = vst [vmem:[%s3 + $0x20] sm:$0xff] %v132
  %218 = vst [vmem:[%s3 + $0x28] sm:$0xff] %v134
  %219 = vst [vmem:[%s3 + $0x30] sm:$0xff] %v209
  %220 = vst [vmem:[%s3 + $0x38] sm:$0xff] %v211
  // Predicated region
  $region14: #{paa_kernel_forward.8} parent=0 // pred_check
    _
  $region15: #{paa_kernel_forward.8} parent=0 // pred_check_branch
    %222 = sbr.rel (0) target = $region17
  $region16: #{paa_kernel_forward.8} parent=0 // pred_region
    _
  $region17: #{paa_kernel_forward.8} parent=0 // pred_fallthru
    _
  // Predicated region
  $region18: #{paa_kernel_forward.8} parent=0 // pred_check
    _
  $region19: #{paa_kernel_forward.8} parent=0 // pred_check_branch
    %224 = sbr.rel (0) target = $region21
  $region20: #{paa_kernel_forward.8} parent=0 // pred_region
    _
  $region21: #{paa_kernel_forward.8} parent=0 // pred_fallthru
    _

// kernel: paa_kernel_forward.10
$region0: #{paa_kernel_forward.10}
  #allocation0 [shape = 'u32[]', space=smem, size = 0x4, offset = 0x4, fixed_abs, tag = 'smem constant byte address 0x4 - core index']
  #allocation1 [shape = 'u32[144,128]{1,0:T(1,128)}', space=vmem, size = 0x12000, scoped, tag = 'internal scratch']
  %s0 = inlined_call_operand.vmem [shape: f32[40,16], index: 0, kind: input, shape index: {}]
  %s1 = inlined_call_operand.vmem [shape: f32[16,512], index: 1, kind: input, shape index: {}]
  %s2 = inlined_call_operand.vmem [shape: f32[40,1], index: 2, kind: input, shape index: {}]
  %s3 = inlined_call_operand.vmem [shape: f32[40,512], index: 3, kind: output, shape index: {}]
  %s4 = sld [smem:[#allocation0]]
  $region22: #{paa_kernel_forward.10} parent=0
    _
  %s6 = ssub.s32 1, %s4
  %s7 = scalar_select 0, %s6, %s4
  // Predicated region
  $region2: #{paa_kernel_forward.10} parent=0 // pred_check
    _
  $region3: #{paa_kernel_forward.10} parent=0 // pred_check_branch
    %9 = sbr.rel (0) target = $region5
  $region4: #{paa_kernel_forward.10} parent=0 // pred_region
    _
  $region5: #{paa_kernel_forward.10} parent=0 // pred_fallthru
    _
  // Predicated region
  $region6: #{paa_kernel_forward.10} parent=0 // pred_check
    _
  $region7: #{paa_kernel_forward.10} parent=0 // pred_check_branch
    %11 = sbr.rel (0) target = $region9
  $region8: #{paa_kernel_forward.10} parent=0 // pred_region
    _
  $region9: #{paa_kernel_forward.10} parent=0 // pred_fallthru
    _
  // Predicated region
  $region10: #{paa_kernel_forward.10} parent=0 // pred_check
    _
  $region11: #{paa_kernel_forward.10} parent=0 // pred_check_branch
    %13 = sbr.rel (0) target = $region13
  $region12: #{paa_kernel_forward.10} parent=0 // pred_region
    _
  $region13: #{paa_kernel_forward.10} parent=0 // pred_fallthru
    _
  %v14 = vld [vmem:[%s0] sm:$0xff]
  %v15 = vld [vmem:[%s0 + $0x8] sm:$0xff]
  %v16 = vld [vmem:[%s0 + $0x10] sm:$0xff]
  %v17 = vld [vmem:[%s0 + $0x18] sm:$0xff]
  %v18 = vld [vmem:[%s0 + $0x20] sm:$0xff]
  %v19 = vld [vmem:[%s1] sm:$0xff]
  %v20 = vld [vmem:[%s1 + $0x8] sm:$0xff]
  %v21 = vld [vmem:[%s1 + $0x10] sm:$0xff]
  %v22 = vld [vmem:[%s1 + $0x18] sm:$0xff]
  %v23 = vld [vmem:[%s1 + $0x20] sm:$0xff]
  %v24 = vld [vmem:[%s1 + $0x28] sm:$0xff]
  %v25 = vld [vmem:[%s1 + $0x30] sm:$0xff]
  %v26 = vld [vmem:[%s1 + $0x38] sm:$0xff]
  %v27 = vld [vmem:[%s2] sm:$0xff]
  %v28 = vld [vmem:[%s2 + $0x8] sm:$0xff]
  %v29 = vld [vmem:[%s2 + $0x10] sm:$0xff]
  %v30 = vld [vmem:[%s2 + $0x18] sm:$0xff]
  %v31 = vld [vmem:[%s2 + $0x20] sm:$0xff]
  %33 = vset.pattern.permute.xlu0 0
  %34 = vperm.xlu0 %33, %v27
  %v35 = vpop.permute.xlu0 %34
  %38 = vset.pattern.permute.xlu0 0
  %39 = vperm.xlu0 %38, %v28
  %v40 = vpop.permute.xlu0 %39
  %43 = vset.pattern.permute.xlu0 0
  %44 = vperm.xlu0 %43, %v29
  %v45 = vpop.permute.xlu0 %44
  %48 = vset.pattern.permute.xlu0 0
  %49 = vperm.xlu0 %48, %v30
  %v50 = vpop.permute.xlu0 %49
  %53 = vset.pattern.permute.xlu0 0
  %54 = vperm.xlu0 %53, %v31
  %v55 = vpop.permute.xlu0 %54
  %vm57 = vcmask 130048
  %v59 = vsel %vm57, %v14, 0
  %v62 = vsel %vm57, %v15, 0
  %v65 = vsel %vm57, %v16, 0
  %v68 = vsel %vm57, %v17, 0
  %v71 = vsel %vm57, %v18, 0
  %73 = vmatprep.subr.mxu0 0.0
  %74 = vmatpush1.msra.mxu0 0.0
  %75 = vmatprep.subr.mxu0 0.0
  %76 = vmatpush1.msra.mxu0 0.0
  %77 = vmatprep.subr.mxu0 0.0
  %78 = vmatpush1.msra.mxu0 0.0
  %79 = vmatprep.subr.mxu0 0.0
  %80 = vmatpush1.msra.mxu0 0.0
  %81 = vmatprep.subr.mxu0 0.0
  %82 = vmatpush1.msra.mxu0 0.0
  %83 = vmatprep.subr.mxu0 0.0
  %84 = vmatpush1.msra.mxu0 0.0
  %85 = vmatprep.subr.mxu0 0.0
  %86 = vmatpush1.msra.mxu0 0.0
  %87 = vmatprep.subr.mxu0 0.0
  %88 = vmatpush1.msra.mxu0 0.0
  %89 = vmatprep.subr.mxu0 0.0
  %90 = vmatpush1.msra.mxu0 0.0
  %91 = vmatprep.subr.mxu0 0.0
  %92 = vmatpush1.msra.mxu0 0.0
  %93 = vmatprep.subr.mxu0 0.0
  %94 = vmatpush1.msra.mxu0 0.0
  %95 = vmatprep.subr.mxu0 0.0
  %96 = vmatpush1.msra.mxu0 0.0
  %97 = vmatprep.subr.mxu0 0.0
  %98 = vmatpush1.msra.mxu0 0.0
  %99 = vmatprep.subr.mxu0 0.0
  %100 = vmatpush1.msra.mxu0 0.0
  %101 = vmatprep.subr.mxu0 %v24
  %102 = vmatpush1.msra.mxu0 %v23
  %103 = vmatprep.subr.mxu0 %v20
  %104 = vmatpush1.msra.mxu0 %v19
  %105 = vmatprep.subr.mxu0 0.0
  %106 = vmatpush2.msra.mxu0 0.0
  %107 = vmatprep.subr.mxu0 0.0
  %108 = vmatpush2.msra.mxu0 0.0
  %109 = vmatprep.subr.mxu0 0.0
  %110 = vmatpush2.msra.mxu0 0.0
  %111 = vmatprep.subr.mxu0 0.0
  %112 = vmatpush2.msra.mxu0 0.0
  %113 = vmatprep.subr.mxu0 0.0
  %114 = vmatpush2.msra.mxu0 0.0
  %115 = vmatprep.subr.mxu0 0.0
  %116 = vmatpush2.msra.mxu0 0.0
  %117 = vmatprep.subr.mxu0 0.0
  %118 = vmatpush2.msra.mxu0 0.0
  %119 = vmatprep.subr.mxu0 0.0
  %120 = vmatpush2.msra.mxu0 0.0
  %121 = vmatprep.subr.mxu0 0.0
  %122 = vmatpush2.msra.mxu0 0.0
  %123 = vmatprep.subr.mxu0 0.0
  %124 = vmatpush2.msra.mxu0 0.0
  %125 = vmatprep.subr.mxu0 0.0
  %126 = vmatpush2.msra.mxu0 0.0
  %127 = vmatprep.subr.mxu0 0.0
  %128 = vmatpush2.msra.mxu0 0.0
  %129 = vmatprep.subr.mxu0 0.0
  %130 = vmatpush2.msra.mxu0 0.0
  %131 = vmatprep.subr.mxu0 0.0
  %132 = vmatpush2.msra.mxu0 0.0
  %133 = vmatprep.subr.mxu0 0.0
  %134 = vmatpush2.msra.mxu0 0.0
  %135 = vmatprep.subr.mxu0 0.0
  %136 = vmatpush2.msra.mxu0 0.0
  %137 = vmatprep.mubr.f32.mxu0 0.0
  %138 = vmatmul.mubr.f32.gmra.mxu0 %v59
  %v139 = vpop.f32.mrf.mxu0
  %v140 = vadd.f32 %v35, %v139
  %v141 = vpop.f32.mrf.mxu0
  %v142 = vadd.f32 %v35, %v141
  %143 = vmatprep.mubr.f32.mxu0 0.0
  %144 = vmatmul.mubr.f32.gmra.mxu0 %v62
  %v145 = vpop.f32.mrf.mxu0
  %v146 = vadd.f32 %v40, %v145
  %v147 = vpop.f32.mrf.mxu0
  %v148 = vadd.f32 %v40, %v147
  %149 = vmatprep.mubr.f32.mxu0 0.0
  %150 = vmatmul.mubr.f32.gmra.mxu0 %v65
  %v151 = vpop.f32.mrf.mxu0
  %v152 = vadd.f32 %v45, %v151
  %v153 = vpop.f32.mrf.mxu0
  %v154 = vadd.f32 %v45, %v153
  %155 = vmatprep.mubr.f32.mxu0 0.0
  %156 = vmatmul.mubr.f32.gmra.mxu0 %v68
  %v157 = vpop.f32.mrf.mxu0
  %v158 = vadd.f32 %v50, %v157
  %v159 = vpop.f32.mrf.mxu0
  %v160 = vadd.f32 %v50, %v159
  %161 = vmatprep.mubr.f32.mxu0 0.0
  %162 = vmatmul.mubr.f32.gmra.mxu0 %v71
  %v163 = vpop.f32.mrf.mxu0
  %v164 = vadd.f32 %v55, %v163
  %v165 = vpop.f32.mrf.mxu0
  %v166 = vadd.f32 %v55, %v165
  %167 = vdwg.mxu0
  %168 = vmatprep.subr.mxu0 0.0
  %169 = vmatpush1.msra.mxu0 0.0
  %170 = vmatprep.subr.mxu0 0.0
  %171 = vmatpush1.msra.mxu0 0.0
  %172 = vmatprep.subr.mxu0 0.0
  %173 = vmatpush1.msra.mxu0 0.0
  %174 = vmatprep.subr.mxu0 0.0
  %175 = vmatpush1.msra.mxu0 0.0
  %176 = vmatprep.subr.mxu0 0.0
  %177 = vmatpush1.msra.mxu0 0.0
  %178 = vmatprep.subr.mxu0 0.0
  %179 = vmatpush1.msra.mxu0 0.0
  %180 = vmatprep.subr.mxu0 0.0
  %181 = vmatpush1.msra.mxu0 0.0
  %182 = vmatprep.subr.mxu0 0.0
  %183 = vmatpush1.msra.mxu0 0.0
  %184 = vmatprep.subr.mxu0 0.0
  %185 = vmatpush1.msra.mxu0 0.0
  %186 = vmatprep.subr.mxu0 0.0
  %187 = vmatpush1.msra.mxu0 0.0
  %188 = vmatprep.subr.mxu0 0.0
  %189 = vmatpush1.msra.mxu0 0.0
  %190 = vmatprep.subr.mxu0 0.0
  %191 = vmatpush1.msra.mxu0 0.0
  %192 = vmatprep.subr.mxu0 0.0
  %193 = vmatpush1.msra.mxu0 0.0
  %194 = vmatprep.subr.mxu0 0.0
  %195 = vmatpush1.msra.mxu0 0.0
  %196 = vmatprep.subr.mxu0 %v26
  %197 = vmatpush1.msra.mxu0 %v25
  %198 = vmatprep.subr.mxu0 %v22
  %199 = vmatpush1.msra.mxu0 %v21
  %200 = vmatprep.subr.mxu0 0.0
  %201 = vmatpush2.msra.mxu0 0.0
  %202 = vmatprep.subr.mxu0 0.0
  %203 = vmatpush2.msra.mxu0 0.0
  %204 = vmatprep.subr.mxu0 0.0
  %205 = vmatpush2.msra.mxu0 0.0
  %206 = vmatprep.subr.mxu0 0.0
  %207 = vmatpush2.msra.mxu0 0.0
  %208 = vmatprep.subr.mxu0 0.0
  %209 = vmatpush2.msra.mxu0 0.0
  %210 = vmatprep.subr.mxu0 0.0
  %211 = vmatpush2.msra.mxu0 0.0
  %212 = vmatprep.subr.mxu0 0.0
  %213 = vmatpush2.msra.mxu0 0.0
  %214 = vmatprep.subr.mxu0 0.0
  %215 = vmatpush2.msra.mxu0 0.0
  %216 = vmatprep.subr.mxu0 0.0
  %217 = vmatpush2.msra.mxu0 0.0
  %218 = vmatprep.subr.mxu0 0.0
  %219 = vmatpush2.msra.mxu0 0.0
  %220 = vmatprep.subr.mxu0 0.0
  %221 = vmatpush2.msra.mxu0 0.0
  %222 = vmatprep.subr.mxu0 0.0
  %223 = vmatpush2.msra.mxu0 0.0
  %224 = vmatprep.subr.mxu0 0.0
  %225 = vmatpush2.msra.mxu0 0.0
  %226 = vmatprep.subr.mxu0 0.0
  %227 = vmatpush2.msra.mxu0 0.0
  %228 = vmatprep.subr.mxu0 0.0
  %229 = vmatpush2.msra.mxu0 0.0
  %230 = vmatprep.subr.mxu0 0.0
  %231 = vmatpush2.msra.mxu0 0.0
  %232 = vmatprep.mubr.f32.mxu0 0.0
  %233 = vmatmul.mubr.f32.gmra.mxu0 %v59
  %v234 = vpop.f32.mrf.mxu0
  %v235 = vadd.f32 %v35, %v234
  %v236 = vpop.f32.mrf.mxu0
  %v237 = vadd.f32 %v35, %v236
  %238 = vmatprep.mubr.f32.mxu0 0.0
  %239 = vmatmul.mubr.f32.gmra.mxu0 %v62
  %v240 = vpop.f32.mrf.mxu0
  %v241 = vadd.f32 %v40, %v240
  %v242 = vpop.f32.mrf.mxu0
  %v243 = vadd.f32 %v40, %v242
  %244 = vmatprep.mubr.f32.mxu0 0.0
  %245 = vmatmul.mubr.f32.gmra.mxu0 %v65
  %v246 = vpop.f32.mrf.mxu0
  %v247 = vadd.f32 %v45, %v246
  %v248 = vpop.f32.mrf.mxu0
  %v249 = vadd.f32 %v45, %v248
  %250 = vmatprep.mubr.f32.mxu0 0.0
  %251 = vmatmul.mubr.f32.gmra.mxu0 %v68
  %v252 = vpop.f32.mrf.mxu0
  %v253 = vadd.f32 %v50, %v252
  %v254 = vpop.f32.mrf.mxu0
  %v255 = vadd.f32 %v50, %v254
  %256 = vmatprep.mubr.f32.mxu0 0.0
  %257 = vmatmul.mubr.f32.gmra.mxu0 %v71
  %v258 = vpop.f32.mrf.mxu0
  %v259 = vadd.f32 %v55, %v258
  %v260 = vpop.f32.mrf.mxu0
  %v261 = vadd.f32 %v55, %v260
  %262 = vdwg.mxu0
  %263 = vst [vmem:[%s3] sm:$0xff] %v140
  %264 = vst [vmem:[%s3 + $0x8] sm:$0xff] %v142
  %265 = vst [vmem:[%s3 + $0x10] sm:$0xff] %v235
  %266 = vst [vmem:[%s3 + $0x18] sm:$0xff] %v237
  %267 = vst [vmem:[%s3 + $0x20] sm:$0xff] %v146
  %268 = vst [vmem:[%s3 + $0x28] sm:$0xff] %v148
  %269 = vst [vmem:[%s3 + $0x30] sm:$0xff] %v241
  %270 = vst [vmem:[%s3 + $0x38] sm:$0xff] %v243
  %271 = vst [vmem:[%s3 + $0x40] sm:$0xff] %v152
  %272 = vst [vmem:[%s3 + $0x48] sm:$0xff] %v154
  %273 = vst [vmem:[%s3 + $0x50] sm:$0xff] %v247
  %274 = vst [vmem:[%s3 + $0x58] sm:$0xff] %v249
  %275 = vst [vmem:[%s3 + $0x60] sm:$0xff] %v158
  %276 = vst [vmem:[%s3 + $0x68] sm:$0xff] %v160
  %277 = vst [vmem:[%s3 + $0x70] sm:$0xff] %v253
  %278 = vst [vmem:[%s3 + $0x78] sm:$0xff] %v255
  %279 = vst [vmem:[%s3 + $0x80] sm:$0xff] %v164
  %280 = vst [vmem:[%s3 + $0x88] sm:$0xff] %v166
  %281 = vst [vmem:[%s3 + $0x90] sm:$0xff] %v259
  %282 = vst [vmem:[%s3 + $0x98] sm:$0xff] %v261
  // Predicated region
  $region14: #{paa_kernel_forward.10} parent=0 // pred_check
    _
  $region15: #{paa_kernel_forward.10} parent=0 // pred_check_branch
    %284 = sbr.rel (0) target = $region17
  $region16: #{paa_kernel_forward.10} parent=0 // pred_region
    _
  $region17: #{paa_kernel_forward.10} parent=0 // pred_fallthru
    _
  // Predicated region
  $region18: #{paa_kernel_forward.10} parent=0 // pred_check
    _
  $region19: #{paa_kernel_forward.10} parent=0 // pred_check_branch
    %286 = sbr.rel (0) target = $region21
  $region20: #{paa_kernel_forward.10} parent=0 // pred_region
    _
  $region21: #{paa_kernel_forward.10} parent=0 // pred_fallthru
    _

// kernel: paa_kernel_forward.11
$region0: #{paa_kernel_forward.11}
  #allocation0 [shape = 'u32[]', space=smem, size = 0x4, offset = 0x4, fixed_abs, tag = 'smem constant byte address 0x4 - core index']
  #allocation1 [shape = 'u32[144,128]{1,0:T(1,128)}', space=vmem, size = 0x12000, scoped, tag = 'internal scratch']
  %s0 = inlined_call_operand.vmem [shape: f32[2,32,16], index: 0, kind: input, shape index: {}]
  %s1 = inlined_call_operand.vmem [shape: f32[2,32,16], index: 1, kind: input, shape index: {}]
  %s2 = inlined_call_operand.vmem [shape: f32[2,256,16], index: 2, kind: input, shape index: {}]
  %s3 = inlined_call_operand.vmem [shape: f32[2,16,256], index: 3, kind: output, shape index: {}]
  %s4 = sld [smem:[#allocation0]]
  $region45: #{paa_kernel_forward.11} parent=0
    _
  %s6 = ssub.s32 1, %s4
  %s7 = scalar_select 0, %s6, %s4
  loop: start=0, step=1, limit=4
  $region2: #{paa_kernel_forward.11} parent=0 // loop_pre_header
    _
  $region3: #{paa_kernel_forward.11} parent=0 // loop_header
    %s9 = sphi 0, %s13
    %p10 = scmp.ge.s32.totalorder %s9, 4
    %s19 = sphi 0, %s21
    %s22 = sphi 0, %s19
    %s23 = sphi 0, %s22
    %s39 = sphi 0, %s23
    %s45 = sphi 0, %s47
    %s48 = sphi 0, %s45
    %s49 = sphi 0, %s48
    %s65 = sphi 0, %s49
    %s71 = sphi 0, %s73
    %s74 = sphi 0, %s71
    %s75 = sphi 0, %s74
    %s91 = sphi 0, %s75
    %s97 = sphi 0, %s99
    %s100 = sphi 0, %s97
    %s101 = sphi 0, %s100
    %s117 = sphi 0, %s101
  $region4: #{paa_kernel_forward.11} parent=0 // loop_header_branch
    %12 = sbr.rel (%p10) target = $region8
  $region5: #{paa_kernel_forward.11} parent=0 // loop_body
    %s14 = ssub.s32 %s9, 1
    %s15 = ssub.s32 %s9, 2
    %s16 = sadd.s32 %s9, 1
    %s17 = ssub.s32 %s9, %s16
    %p18 = scmp.eq.s32.totalorder %s17, 0
    %s20 = sadd.s32 %s19, 1
    %s21 = scalar_select %p18, %s19, %s20
    %p24 = pneg %p18
    %p25 = scmp.eq.s32.totalorder %s9, 1
    %p26 = por %p24, %p25
    %p27 = scmp.ne.s32.totalorder %s19, %s22
    %p28 = scmp.eq.s32.totalorder %s9, 0
    %p29 = por %p27, %p28
    %p30 = scmp.ne.s32.totalorder %s19, %s22
    %p31 = scmp.eq.s32.totalorder %s14, 1
    %p32 = por %p30, %p31
    %p33 = scmp.ne.s32.totalorder %s22, %s23
    %p34 = scmp.eq.s32.totalorder %s14, 0
    %p35 = por %p33, %p34
    %p36 = scmp.ne.s32.totalorder %s22, %s23
    %p37 = scmp.eq.s32.totalorder %s15, 1
    %p38 = por %p36, %p37
    %p40 = scmp.ne.s32.totalorder %s23, %s39
    %p41 = scmp.eq.s32.totalorder %s15, 0
    %p42 = por %p40, %p41
    %s43 = ssub.s32 %s9, %s16
    %p44 = scmp.eq.s32.totalorder %s43, 0
    %s46 = sadd.s32 %s45, 1
    %s47 = scalar_select %p44, %s45, %s46
    %p50 = pneg %p44
    %p51 = scmp.eq.s32.totalorder %s9, 1
    %p52 = por %p50, %p51
    %p53 = scmp.ne.s32.totalorder %s45, %s48
    %p54 = scmp.eq.s32.totalorder %s9, 0
    %p55 = por %p53, %p54
    %p56 = scmp.ne.s32.totalorder %s45, %s48
    %p57 = scmp.eq.s32.totalorder %s14, 1
    %p58 = por %p56, %p57
    %p59 = scmp.ne.s32.totalorder %s48, %s49
    %p60 = scmp.eq.s32.totalorder %s14, 0
    %p61 = por %p59, %p60
    %p62 = scmp.ne.s32.totalorder %s48, %s49
    %p63 = scmp.eq.s32.totalorder %s15, 1
    %p64 = por %p62, %p63
    %p66 = scmp.ne.s32.totalorder %s49, %s65
    %p67 = scmp.eq.s32.totalorder %s15, 0
    %p68 = por %p66, %p67
    %s69 = ssub.s32 %s9, %s16
    %p70 = scmp.eq.s32.totalorder %s69, 0
    %s72 = sadd.s32 %s71, 1
    %s73 = scalar_select %p70, %s71, %s72
    %p76 = pneg %p70
    %p77 = scmp.eq.s32.totalorder %s9, 1
    %p78 = por %p76, %p77
    %p79 = scmp.ne.s32.totalorder %s71, %s74
    %p80 = scmp.eq.s32.totalorder %s9, 0
    %p81 = por %p79, %p80
    %p82 = scmp.ne.s32.totalorder %s71, %s74
    %p83 = scmp.eq.s32.totalorder %s14, 1
    %p84 = por %p82, %p83
    %p85 = scmp.ne.s32.totalorder %s74, %s75
    %p86 = scmp.eq.s32.totalorder %s14, 0
    %p87 = por %p85, %p86
    %p88 = scmp.ne.s32.totalorder %s74, %s75
    %p89 = scmp.eq.s32.totalorder %s15, 1
    %p90 = por %p88, %p89
    %p92 = scmp.ne.s32.totalorder %s75, %s91
    %p93 = scmp.eq.s32.totalorder %s15, 0
    %p94 = por %p92, %p93
    %s95 = ssub.s32 %s9, %s16
    %p96 = scmp.eq.s32.totalorder %s95, 0
    %s98 = sadd.s32 %s97, 1
    %s99 = scalar_select %p96, %s97, %s98
    %p102 = pneg %p96
    %p103 = scmp.eq.s32.totalorder %s9, 1
    %p104 = por %p102, %p103
    %p105 = scmp.ne.s32.totalorder %s97, %s100
    %p106 = scmp.eq.s32.totalorder %s9, 0
    %p107 = por %p105, %p106
    %p108 = scmp.ne.s32.totalorder %s97, %s100
    %p109 = scmp.eq.s32.totalorder %s14, 1
    %p110 = por %p108, %p109
    %p111 = scmp.ne.s32.totalorder %s100, %s101
    %p112 = scmp.eq.s32.totalorder %s14, 0
    %p113 = por %p111, %p112
    %p114 = scmp.ne.s32.totalorder %s100, %s101
    %p115 = scmp.eq.s32.totalorder %s15, 1
    %p116 = por %p114, %p115
    %p118 = scmp.ne.s32.totalorder %s101, %s117
    %p119 = scmp.eq.s32.totalorder %s15, 0
    %p120 = por %p118, %p119
    %p121 = scmp.le.s32.totalorder 1, %s9
    %p122 = scmp.lt.s32.totalorder %s9, 3
    %p123 = pnand %p121, %p122
    %p124 = pneg %p123
    // Predicated region
    $region9: #{paa_kernel_forward.11} parent=5 // pred_check
      _
    $region10: #{paa_kernel_forward.11} parent=5 // pred_check_branch
      %126 = sbr.rel (%p123) target = $region12
    $region11: #{paa_kernel_forward.11} parent=5 // pred_region
      %s127 = ssub.s32 %s9, 1
    $region12: #{paa_kernel_forward.11} parent=5 // pred_fallthru
      _
    %p128 = scmp.lt.s32.totalorder %s9, 2
    // Predicated region
    $region13: #{paa_kernel_forward.11} parent=5 // pred_check
      %p129 = pneg %p128
    $region14: #{paa_kernel_forward.11} parent=5 // pred_check_branch
      %131 = sbr.rel (%p129) target = $region16
    $region15: #{paa_kernel_forward.11} parent=5 // pred_region
      // Predicated region
      $region17: #{paa_kernel_forward.11} parent=15 // pred_check
        %p132 = pneg %p29
      $region18: #{paa_kernel_forward.11} parent=15 // pred_check_branch
        %134 = sbr.rel (%p132) target = $region20
      $region19: #{paa_kernel_forward.11} parent=15 // pred_region
        %p135 = scmp.lt.s32.totalorder %s9, 1
        %s136 = scalar_select %p135, %s9, 1
        %s137 = smul.addr %s136, 4
        %s138 = smul.addr %s137, 8
        %s139 = scalar_lea.vmem %s0, %s138
      $region20: #{paa_kernel_forward.11} parent=15 // pred_fallthru
        _
      // Predicated region
      $region21: #{paa_kernel_forward.11} parent=15 // pred_check
        %p140 = pneg %p55
      $region22: #{paa_kernel_forward.11} parent=15 // pred_check_branch
        %142 = sbr.rel (%p140) target = $region24
      $region23: #{paa_kernel_forward.11} parent=15 // pred_region
        %p143 = scmp.lt.s32.totalorder %s9, 1
        %s144 = scalar_select %p143, %s9, 1
        %s145 = smul.addr %s144, 4
        %s146 = smul.addr %s145, 8
        %s147 = scalar_lea.vmem %s1, %s146
      $region24: #{paa_kernel_forward.11} parent=15 // pred_fallthru
        _
      // Predicated region
      $region25: #{paa_kernel_forward.11} parent=15 // pred_check
        %p148 = pneg %p81
      $region26: #{paa_kernel_forward.11} parent=15 // pred_check_branch
        %150 = sbr.rel (%p148) target = $region28
      $region27: #{paa_kernel_forward.11} parent=15 // pred_region
        %p151 = scmp.lt.s32.totalorder %s9, 1
        %s152 = scalar_select %p151, %s9, 1
        %s153 = smul.addr %s152, 32
        %s154 = smul.addr %s153, 8
        %s155 = scalar_lea.vmem %s2, %s154
      $region28: #{paa_kernel_forward.11} parent=15 // pred_fallthru
        _
    $region16: #{paa_kernel_forward.11} parent=5 // pred_fallthru
      _
    %p156 = scmp.le.s32.totalorder 1, %s9
    %p157 = scmp.lt.s32.totalorder %s9, 3
    %p158 = pnand %p156, %p157
    %p159 = pneg %p158
    // Predicated region
    $region29: #{paa_kernel_forward.11} parent=5 // pred_check
      _
    $region30: #{paa_kernel_forward.11} parent=5 // pred_check_branch
      %161 = sbr.rel (%p158) target = $region32
    $region31: #{paa_kernel_forward.11} parent=5 // pred_region
      %s162 = ssub.s32 %s9, 1
      %p163 = scmp.lt.s32.totalorder %s14, 1
      %s164 = scalar_select %p163, %s14, 1
      %s165 = smul.addr %s164, 4
      %s166 = smul.addr %s165, 8
      %s167 = scalar_lea.vmem %s0, %s166
      %p168 = pneg %p35
      %p169 = pneg %p32
      %p170 = scmp.lt.s32.totalorder %s14, 1
      %s171 = scalar_select %p170, %s14, 1
      %s172 = smul.addr %s171, 4
      %s173 = smul.addr %s172, 8
      %s174 = scalar_lea.vmem %s1, %s173
      %p175 = pneg %p61
      %p176 = pneg %p58
      %p177 = scmp.lt.s32.totalorder %s14, 1
      %s178 = scalar_select %p177, %s14, 1
      %s179 = smul.addr %s178, 32
      %s180 = smul.addr %s179, 8
      %s181 = scalar_lea.vmem %s2, %s180
      %p182 = pneg %p87
      %p183 = pneg %p84
      %p184 = pneg %p113
      %p185 = pneg %p110
      %p186 = scmp.lt.s32.totalorder %s14, 1
      %s187 = scalar_select %p186, %s14, 1
      %s188 = smul.addr %s187, 4
      %s189 = smul.addr %s188, 8
      %s190 = scalar_lea.vmem %s3, %s189
      %p191 = scmp.lt.s32.totalorder %s14, 1
      %s192 = scalar_select %p191, %s14, 1
      %s193 = smul.addr %s192, 4
      %s194 = smul.addr %s193, 8
      %s195 = scalar_lea.vmem %s0, %s194
      %p196 = scmp.lt.s32.totalorder %s14, 1
      %s197 = scalar_select %p196, %s14, 1
      %s198 = smul.addr %s197, 4
      %s199 = smul.addr %s198, 8
      %s200 = scalar_lea.vmem %s1, %s199
      %p201 = scmp.lt.s32.totalorder %s14, 1
      %s202 = scalar_select %p201, %s14, 1
      %s203 = smul.addr %s202, 32
      %s204 = smul.addr %s203, 8
      %s205 = scalar_lea.vmem %s2, %s204
      %p206 = scmp.lt.s32.totalorder %s14, 1
      %s207 = scalar_select %p206, %s14, 1
      %s208 = smul.addr %s207, 4
      %s209 = smul.addr %s208, 8
      %s210 = scalar_lea.vmem %s3, %s209
      %v211 = vld [vmem:[%s195] sm:$0xff]
      %v212 = vld [vmem:[%s195 + $0x8] sm:$0xff]
      %v213 = vld [vmem:[%s195 + $0x10] sm:$0xff]
      %v214 = vld [vmem:[%s195 + $0x18] sm:$0xff]
      %v215 = vld [vmem:[%s200] sm:$0xff]
      %v216 = vld [vmem:[%s200 + $0x8] sm:$0xff]
      %v217 = vld [vmem:[%s200 + $0x10] sm:$0xff]
      %v218 = vld [vmem:[%s200 + $0x18] sm:$0xff]
      %v219 = vld [vmem:[%s205] sm:$0xff]
      %v220 = vld [vmem:[%s205 + $0x8] sm:$0xff]
      %v221 = vld [vmem:[%s205 + $0x10] sm:$0xff]
      %v222 = vld [vmem:[%s205 + $0x18] sm:$0xff]
      %v223 = vld [vmem:[%s205 + $0x20] sm:$0xff]
      %v224 = vld [vmem:[%s205 + $0x28] sm:$0xff]
      %v225 = vld [vmem:[%s205 + $0x30] sm:$0xff]
      %v226 = vld [vmem:[%s205 + $0x38] sm:$0xff]
      %v227 = vld [vmem:[%s205 + $0x40] sm:$0xff]
      %v228 = vld [vmem:[%s205 + $0x48] sm:$0xff]
      %v229 = vld [vmem:[%s205 + $0x50] sm:$0xff]
      %v230 = vld [vmem:[%s205 + $0x58] sm:$0xff]
      %v231 = vld [vmem:[%s205 + $0x60] sm:$0xff]
      %v232 = vld [vmem:[%s205 + $0x68] sm:$0xff]
      %v233 = vld [vmem:[%s205 + $0x70] sm:$0xff]
      %v234 = vld [vmem:[%s205 + $0x78] sm:$0xff]
      %v235 = vld [vmem:[%s205 + $0x80] sm:$0xff]
      %v236 = vld [vmem:[%s205 + $0x88] sm:$0xff]
      %v237 = vld [vmem:[%s205 + $0x90] sm:$0xff]
      %v238 = vld [vmem:[%s205 + $0x98] sm:$0xff]
      %v239 = vld [vmem:[%s205 + $0xa0] sm:$0xff]
      %v240 = vld [vmem:[%s205 + $0xa8] sm:$0xff]
      %v241 = vld [vmem:[%s205 + $0xb0] sm:$0xff]
      %v242 = vld [vmem:[%s205 + $0xb8] sm:$0xff]
      %v243 = vld [vmem:[%s205 + $0xc0] sm:$0xff]
      %v244 = vld [vmem:[%s205 + $0xc8] sm:$0xff]
      %v245 = vld [vmem:[%s205 + $0xd0] sm:$0xff]
      %v246 = vld [vmem:[%s205 + $0xd8] sm:$0xff]
      %v247 = vld [vmem:[%s205 + $0xe0] sm:$0xff]
      %v248 = vld [vmem:[%s205 + $0xe8] sm:$0xff]
      %v249 = vld [vmem:[%s205 + $0xf0] sm:$0xff]
      %v250 = vld [vmem:[%s205 + $0xf8] sm:$0xff]
      %251 = vxpose.xlu0.b32.start [1/16] %v211, 128
      %252 = vxpose.xlu0.b32.cont [2/16] %v212, 128
      %253 = vxpose.xlu0.b32.cont [3/16] %v213, 128
      %254 = vxpose.xlu0.b32.cont [4/16] %v214, 128
      %255 = vxpose.xlu0.b32.cont [5/16] 0.0, 128
      %256 = vxpose.xlu0.b32.cont [6/16] 0.0, 128
      %257 = vxpose.xlu0.b32.cont [7/16] 0.0, 128
      %258 = vxpose.xlu0.b32.cont [8/16] 0.0, 128
      %259 = vxpose.xlu0.b32.cont [9/16] 0.0, 128
      %260 = vxpose.xlu0.b32.cont [10/16] 0.0, 128
      %261 = vxpose.xlu0.b32.cont [11/16] 0.0, 128
      %262 = vxpose.xlu0.b32.cont [12/16] 0.0, 128
      %263 = vxpose.xlu0.b32.cont [13/16] 0.0, 128
      %264 = vxpose.xlu0.b32.cont [14/16] 0.0, 128
      %265 = vxpose.xlu0.b32.cont [15/16] 0.0, 128
      %266 = vxpose.xlu0.b32.end [16/16] 0.0, 128
      %v267 = vpop.trf.xlu0
      %v268 = vpop.trf.xlu0
      %v269 = vpop.trf.xlu0
      %v270 = vpop.trf.xlu0
      %v271 = vpop.trf.xlu0
      %v272 = vpop.trf.xlu0
      %v273 = vpop.trf.xlu0
      %v274 = vpop.trf.xlu0
      %v275 = vpop.trf.xlu0
      %v276 = vpop.trf.xlu0
      %v277 = vpop.trf.xlu0
      %v278 = vpop.trf.xlu0
      %v279 = vpop.trf.xlu0
      %v280 = vpop.trf.xlu0
      %v281 = vpop.trf.xlu0
      %v282 = vpop.trf.xlu0
      %vm283 = vcmask 261120
      %v285 = vsel %vm283, %v267, 0
      %v288 = vsel %vm283, %v268, 0
      %290 = vmatprep.subr.mxu0 0.0
      %291 = vmatpush1.msra.mxu0 0.0
      %292 = vmatprep.subr.mxu0 0.0
      %293 = vmatpush1.msra.mxu0 0.0
      %294 = vmatprep.subr.mxu0 0.0
      %295 = vmatpush1.msra.mxu0 0.0
      %296 = vmatprep.subr.mxu0 0.0
      %297 = vmatpush1.msra.mxu0 0.0
      %298 = vmatprep.subr.mxu0 0.0
      %299 = vmatpush1.msra.mxu0 0.0
      %300 = vmatprep.subr.mxu0 0.0
      %301 = vmatpush1.msra.mxu0 0.0
      %302 = vmatprep.subr.mxu0 0.0
      %303 = vmatpush1.msra.mxu0 0.0
      %304 = vmatprep.subr.mxu0 0.0
      %305 = vmatpush1.msra.mxu0 0.0
      %306 = vmatprep.subr.mxu0 0.0
      %307 = vmatpush1.msra.mxu0 0.0
      %308 = vmatprep.subr.mxu0 0.0
      %309 = vmatpush1.msra.mxu0 0.0
      %310 = vmatprep.subr.mxu0 0.0
      %311 = vmatpush1.msra.mxu0 0.0
      %312 = vmatprep.subr.mxu0 0.0
      %313 = vmatpush1.msra.mxu0 0.0
      %314 = vmatprep.subr.mxu0 0.0
      %315 = vmatpush1.msra.mxu0 %v218
      %316 = vmatprep.subr.mxu0 0.0
      %317 = vmatpush1.msra.mxu0 %v217
      %318 = vmatprep.subr.mxu0 0.0
      %319 = vmatpush1.msra.mxu0 %v216
      %320 = vmatprep.subr.mxu0 0.0
      %321 = vmatpush1.msra.mxu0 %v215
      %322 = vmatprep.subr.mxu0 0.0
      %323 = vmatpush2.msra.mxu0 0.0
      %324 = vmatprep.subr.mxu0 0.0
      %325 = vmatpush2.msra.mxu0 0.0
      %326 = vmatprep.subr.mxu0 0.0
      %327 = vmatpush2.msra.mxu0 0.0
      %328 = vmatprep.subr.mxu0 0.0
      %329 = vmatpush2.msra.mxu0 0.0
      %330 = vmatprep.subr.mxu0 0.0
      %331 = vmatpush2.msra.mxu0 0.0
      %332 = vmatprep.subr.mxu0 0.0
      %333 = vmatpush2.msra.mxu0 0.0
      %334 = vmatprep.subr.mxu0 0.0
      %335 = vmatpush2.msra.mxu0 0.0
      %336 = vmatprep.subr.mxu0 0.0
      %337 = vmatpush2.msra.mxu0 0.0
      %338 = vmatprep.subr.mxu0 0.0
      %339 = vmatpush2.msra.mxu0 0.0
      %340 = vmatprep.subr.mxu0 0.0
      %341 = vmatpush2.msra.mxu0 0.0
      %342 = vmatprep.subr.mxu0 0.0
      %343 = vmatpush2.msra.mxu0 0.0
      %344 = vmatprep.subr.mxu0 0.0
      %345 = vmatpush2.msra.mxu0 0.0
      %346 = vmatprep.subr.mxu0 0.0
      %347 = vmatpush2.msra.mxu0 0.0
      %348 = vmatprep.subr.mxu0 0.0
      %349 = vmatpush2.msra.mxu0 0.0
      %350 = vmatprep.subr.mxu0 0.0
      %351 = vmatpush2.msra.mxu0 0.0
      %352 = vmatprep.subr.mxu0 0.0
      %353 = vmatpush2.msra.mxu0 0.0
      %354 = vmatprep.mubr.f32.mxu0 0.0
      %355 = vmatmul.mubr.f32.gmra.mxu0 %v285
      %v356 = vpop.f32.mrf.mxu0
      %v357 = vadd.f32 0.0, %v356
      %v358 = vpop.f32.mrf.mxu0
      %359 = vmatprep.mubr.f32.mxu0 0.0
      %360 = vmatmul.mubr.f32.gmra.mxu0 %v288
      %v361 = vpop.f32.mrf.mxu0
      %v362 = vadd.f32 0.0, %v361
      %v363 = vpop.f32.mrf.mxu0
      %364 = vdwg.mxu0
      %vm365 = vcmask 130048
      %v366 = vsel %vm365, %v357, -inf
      %367 = vmax.xlane.f32.xlu0 %v366
      %v368 = vpop.xlane.xlu0 %367
      %v369 = vsel %vm365, %v362, -inf
      %370 = vmax.xlane.f32.xlu0 %v369
      %v371 = vpop.xlane.xlu0 %370
      %v372 = vsub.f32 %v357, %v368
      %v373 = vsub.f32 %v362, %v371
      %v374 = vmul.f32 %v372, 1.442695
      %v375 = vpow.pop %v374
      %v376 = vmul.f32 %v373, 1.442695
      %v377 = vpow.pop %v376
      %v378 = vsel %vm365, %v375, 0.0
      %379 = vadd.xlane.f32.xlu0 %v378
      %v380 = vpop.xlane.xlu0 %379
      %v381 = vsel %vm365, %v377, 0.0
      %382 = vadd.xlane.f32.xlu0 %v381
      %v383 = vpop.xlane.xlu0 %382
      %v384 = vrcp.pop %v380
      %v385 = vmul.f32 %v375, %v384
      %v386 = vrcp.pop %v383
      %v387 = vmul.f32 %v377, %v386
      %v389 = vsel %vm365, %v385, 0
      %v392 = vsel %vm365, %v387, 0
      %v395 = vsel %vm365, %v219, 0
      %v398 = vsel %vm365, %v220, 0
      %v401 = vsel %vm365, %v221, 0
      %v404 = vsel %vm365, %v222, 0
      %v407 = vsel %vm365, %v223, 0
      %v410 = vsel %vm365, %v224, 0
      %v413 = vsel %vm365, %v225, 0
      %v416 = vsel %vm365, %v226, 0
      %v419 = vsel %vm365, %v227, 0
      %v422 = vsel %vm365, %v228, 0
      %v425 = vsel %vm365, %v229, 0
      %v428 = vsel %vm365, %v230, 0
      %v431 = vsel %vm365, %v231, 0
      %v434 = vsel %vm365, %v232, 0
      %v437 = vsel %vm365, %v233, 0
      %v440 = vsel %vm365, %v234, 0
      %v443 = vsel %vm365, %v235, 0
      %v446 = vsel %vm365, %v236, 0
      %v449 = vsel %vm365, %v237, 0
      %v452 = vsel %vm365, %v238, 0
      %v455 = vsel %vm365, %v239, 0
      %v458 = vsel %vm365, %v240, 0
      %v461 = vsel %vm365, %v241, 0
      %v464 = vsel %vm365, %v242, 0
      %v467 = vsel %vm365, %v243, 0
      %v470 = vsel %vm365, %v244, 0
      %v473 = vsel %vm365, %v245, 0
      %v476 = vsel %vm365, %v246, 0
      %v479 = vsel %vm365, %v247, 0
      %v482 = vsel %vm365, %v248, 0
      %v485 = vsel %vm365, %v249, 0
      %v488 = vsel %vm365, %v250, 0
      %490 = vmatprep.subr.mxu0 0.0
      %491 = vmatpush1.xpose.msra.mxu0 %v440
      %492 = vmatprep.subr.mxu0 0.0
      %493 = vmatpush1.xpose.msra.mxu0 %v437
      %494 = vmatprep.subr.mxu0 0.0
      %495 = vmatpush1.xpose.msra.mxu0 %v434
      %496 = vmatprep.subr.mxu0 0.0
      %497 = vmatpush1.xpose.msra.mxu0 %v431
      %498 = vmatprep.subr.mxu0 0.0
      %499 = vmatpush1.xpose.msra.mxu0 %v428
      %500 = vmatprep.subr.mxu0 0.0
      %501 = vmatpush1.xpose.msra.mxu0 %v425
      %502 = vmatprep.subr.mxu0 0.0
      %503 = vmatpush1.xpose.msra.mxu0 %v422
      %504 = vmatprep.subr.mxu0 0.0
      %505 = vmatpush1.xpose.msra.mxu0 %v419
      %506 = vmatprep.subr.mxu0 0.0
      %507 = vmatpush1.xpose.msra.mxu0 %v416
      %508 = vmatprep.subr.mxu0 0.0
      %509 = vmatpush1.xpose.msra.mxu0 %v413
      %510 = vmatprep.subr.mxu0 0.0
      %511 = vmatpush1.xpose.msra.mxu0 %v410
      %512 = vmatprep.subr.mxu0 0.0
      %513 = vmatpush1.xpose.msra.mxu0 %v407
      %514 = vmatprep.subr.mxu0 0.0
      %515 = vmatpush1.xpose.msra.mxu0 %v404
      %516 = vmatprep.subr.mxu0 0.0
      %517 = vmatpush1.xpose.msra.mxu0 %v401
      %518 = vmatprep.subr.mxu0 0.0
      %519 = vmatpush1.xpose.msra.mxu0 %v398
      %520 = vmatprep.subr.mxu0 0.0
      %521 = vmatpush1.xpose.msra.mxu0 %v395
      %522 = vmatprep.subr.mxu0 0.0
      %523 = vmatpush2.xpose.msra.mxu0 %v488
      %524 = vmatprep.subr.mxu0 0.0
      %525 = vmatpush2.xpose.msra.mxu0 %v485
      %526 = vmatprep.subr.mxu0 0.0
      %527 = vmatpush2.xpose.msra.mxu0 %v482
      %528 = vmatprep.subr.mxu0 0.0
      %529 = vmatpush2.xpose.msra.mxu0 %v479
      %530 = vmatprep.subr.mxu0 0.0
      %531 = vmatpush2.xpose.msra.mxu0 %v476
      %532 = vmatprep.subr.mxu0 0.0
      %533 = vmatpush2.xpose.msra.mxu0 %v473
      %534 = vmatprep.subr.mxu0 0.0
      %535 = vmatpush2.xpose.msra.mxu0 %v470
      %536 = vmatprep.subr.mxu0 0.0
      %537 = vmatpush2.xpose.msra.mxu0 %v467
      %538 = vmatprep.subr.mxu0 0.0
      %539 = vmatpush2.xpose.msra.mxu0 %v464
      %540 = vmatprep.subr.mxu0 0.0
      %541 = vmatpush2.xpose.msra.mxu0 %v461
      %542 = vmatprep.subr.mxu0 0.0
      %543 = vmatpush2.xpose.msra.mxu0 %v458
      %544 = vmatprep.subr.mxu0 0.0
      %545 = vmatpush2.xpose.msra.mxu0 %v455
      %546 = vmatprep.subr.mxu0 0.0
      %547 = vmatpush2.xpose.msra.mxu0 %v452
      %548 = vmatprep.subr.mxu0 0.0
      %549 = vmatpush2.xpose.msra.mxu0 %v449
      %550 = vmatprep.subr.mxu0 0.0
      %551 = vmatpush2.xpose.msra.mxu0 %v446
      %552 = vmatprep.subr.mxu0 0.0
      %553 = vmatpush2.xpose.msra.mxu0 %v443
      %554 = vmatprep.mubr.f32.mxu0 0.0
      %555 = vmatmul.mubr.f32.gmra.mxu0 %v389
      %v556 = vpop.f32.mrf.mxu0
      %v557 = vadd.f32 0.0, %v556
      %v558 = vpop.f32.mrf.mxu0
      %v559 = vadd.f32 0.0, %v558
      %560 = vmatprep.mubr.f32.mxu0 0.0
      %561 = vmatmul.mubr.f32.gmra.mxu0 %v392
      %v562 = vpop.f32.mrf.mxu0
      %v563 = vadd.f32 0.0, %v562
      %v564 = vpop.f32.mrf.mxu0
      %v565 = vadd.f32 0.0, %v564
      %566 = vdwg.mxu0
      %567 = vst [vmem:[%s210] sm:$0xff] %v557
      %568 = vst [vmem:[%s210 + $0x8] sm:$0xff] %v559
      %569 = vst [vmem:[%s210 + $0x10] sm:$0xff] %v563
      %570 = vst [vmem:[%s210 + $0x18] sm:$0xff] %v565
      %p571 = scmp.lt.s32.totalorder %s14, 1
      %s572 = scalar_select %p571, %s14, 1
      %s573 = smul.addr %s572, 4
      %s574 = smul.addr %s573, 8
      %s575 = scalar_lea.vmem %s3, %s574
      // Predicated region
      $region33: #{paa_kernel_forward.11} parent=31 // pred_check
        %p576 = pneg %p110
      $region34: #{paa_kernel_forward.11} parent=31 // pred_check_branch
        %578 = sbr.rel (%p576) target = $region36
      $region35: #{paa_kernel_forward.11} parent=31 // pred_region
        _
      $region36: #{paa_kernel_forward.11} parent=31 // pred_fallthru
        _
    $region32: #{paa_kernel_forward.11} parent=5 // pred_fallthru
      _
    %p579 = scmp.le.s32.totalorder 2, %s9
    // Predicated region
    $region37: #{paa_kernel_forward.11} parent=5 // pred_check
      %p580 = pneg %p579
    $region38: #{paa_kernel_forward.11} parent=5 // pred_check_branch
      %582 = sbr.rel (%p580) target = $region40
    $region39: #{paa_kernel_forward.11} parent=5 // pred_region
      %s583 = ssub.s32 %s9, 2
      // Predicated region
      $region41: #{paa_kernel_forward.11} parent=39 // pred_check
        %p584 = pneg %p116
      $region42: #{paa_kernel_forward.11} parent=39 // pred_check_branch
        %586 = sbr.rel (%p584) target = $region44
      $region43: #{paa_kernel_forward.11} parent=39 // pred_region
        %p587 = scmp.lt.s32.totalorder %s15, 1
        %s588 = scalar_select %p587, %s15, 1
        %s589 = smul.addr %s588, 4
        %s590 = smul.addr %s589, 8
        %s591 = scalar_lea.vmem %s3, %s590
      $region44: #{paa_kernel_forward.11} parent=39 // pred_fallthru
        _
    $region40: #{paa_kernel_forward.11} parent=5 // pred_fallthru
      _
  $region6: #{paa_kernel_forward.11} parent=0 // loop_footer
    %s13 = sadd.s32 1, %s9
  $region7: #{paa_kernel_forward.11} parent=0 // loop_footer_branch
    %8 = sbr.rel target = $region3
  $region8: #{paa_kernel_forward.11} parent=0 // loop_exit
    _

// kernel: paa_kernel_forward.13
$region0: #{paa_kernel_forward.13}
  #allocation0 [shape = 'u32[]', space=smem, size = 0x4, offset = 0x4, fixed_abs, tag = 'smem constant byte address 0x4 - core index']
  #allocation1 [shape = 'u32[144,128]{1,0:T(1,128)}', space=vmem, size = 0x12000, scoped, tag = 'internal scratch']
  %s0 = inlined_call_operand.vmem [shape: f32[16,144], index: 0, kind: input, shape index: {}]
  %s1 = inlined_call_operand.vmem [shape: f32[144,512], index: 1, kind: input, shape index: {}]
  %s2 = inlined_call_operand.vmem [shape: f32[16,1], index: 2, kind: input, shape index: {}]
  %s3 = inlined_call_operand.vmem [shape: f32[16,512], index: 3, kind: output, shape index: {}]
  %s4 = sld [smem:[#allocation0]]
  $region22: #{paa_kernel_forward.13} parent=0
    _
  %s6 = ssub.s32 1, %s4
  %s7 = scalar_select 0, %s6, %s4
  // Predicated region
  $region2: #{paa_kernel_forward.13} parent=0 // pred_check
    _
  $region3: #{paa_kernel_forward.13} parent=0 // pred_check_branch
    %9 = sbr.rel (0) target = $region5
  $region4: #{paa_kernel_forward.13} parent=0 // pred_region
    _
  $region5: #{paa_kernel_forward.13} parent=0 // pred_fallthru
    _
  // Predicated region
  $region6: #{paa_kernel_forward.13} parent=0 // pred_check
    _
  $region7: #{paa_kernel_forward.13} parent=0 // pred_check_branch
    %11 = sbr.rel (0) target = $region9
  $region8: #{paa_kernel_forward.13} parent=0 // pred_region
    _
  $region9: #{paa_kernel_forward.13} parent=0 // pred_fallthru
    _
  // Predicated region
  $region10: #{paa_kernel_forward.13} parent=0 // pred_check
    _
  $region11: #{paa_kernel_forward.13} parent=0 // pred_check_branch
    %13 = sbr.rel (0) target = $region13
  $region12: #{paa_kernel_forward.13} parent=0 // pred_region
    _
  $region13: #{paa_kernel_forward.13} parent=0 // pred_fallthru
    _
  %v14 = vld [vmem:[%s0] sm:$0xff]
  %v15 = vld [vmem:[%s0 + $0x8] sm:$0xff]
  %v16 = vld [vmem:[%s0 + $0x10] sm:$0xff]
  %v17 = vld [vmem:[%s0 + $0x18] sm:$0xff]
  %v18 = vld [vmem:[%s1] sm:$0xff]
  %v19 = vld [vmem:[%s1 + $0x8] sm:$0xff]
  %v20 = vld [vmem:[%s1 + $0x10] sm:$0xff]
  %v21 = vld [vmem:[%s1 + $0x18] sm:$0xff]
  %v22 = vld [vmem:[%s1 + $0x20] sm:$0xff]
  %v23 = vld [vmem:[%s1 + $0x28] sm:$0xff]
  %v24 = vld [vmem:[%s1 + $0x30] sm:$0xff]
  %v25 = vld [vmem:[%s1 + $0x38] sm:$0xff]
  %v26 = vld [vmem:[%s1 + $0x40] sm:$0xff]
  %v27 = vld [vmem:[%s1 + $0x48] sm:$0xff]
  %v28 = vld [vmem:[%s1 + $0x50] sm:$0xff]
  %v29 = vld [vmem:[%s1 + $0x58] sm:$0xff]
  %v30 = vld [vmem:[%s1 + $0x60] sm:$0xff]
  %v31 = vld [vmem:[%s1 + $0x68] sm:$0xff]
  %v32 = vld [vmem:[%s1 + $0x70] sm:$0xff]
  %v33 = vld [vmem:[%s1 + $0x78] sm:$0xff]
  %v34 = vld [vmem:[%s1 + $0x80] sm:$0xff]
  %v35 = vld [vmem:[%s1 + $0x88] sm:$0xff]
  %v36 = vld [vmem:[%s1 + $0x90] sm:$0xff]
  %v37 = vld [vmem:[%s1 + $0x98] sm:$0xff]
  %v38 = vld [vmem:[%s1 + $0xa0] sm:$0xff]
  %v39 = vld [vmem:[%s1 + $0xa8] sm:$0xff]
  %v40 = vld [vmem:[%s1 + $0xb0] sm:$0xff]
  %v41 = vld [vmem:[%s1 + $0xb8] sm:$0xff]
  %v42 = vld [vmem:[%s1 + $0xc0] sm:$0xff]
  %v43 = vld [vmem:[%s1 + $0xc8] sm:$0xff]
  %v44 = vld [vmem:[%s1 + $0xd0] sm:$0xff]
  %v45 = vld [vmem:[%s1 + $0xd8] sm:$0xff]
  %v46 = vld [vmem:[%s1 + $0xe0] sm:$0xff]
  %v47 = vld [vmem:[%s1 + $0xe8] sm:$0xff]
  %v48 = vld [vmem:[%s1 + $0xf0] sm:$0xff]
  %v49 = vld [vmem:[%s1 + $0xf8] sm:$0xff]
  %v50 = vld [vmem:[%s1 + $0x100] sm:$0xff]
  %v51 = vld [vmem:[%s1 + $0x108] sm:$0xff]
  %v52 = vld [vmem:[%s1 + $0x110] sm:$0xff]
  %v53 = vld [vmem:[%s1 + $0x118] sm:$0xff]
  %v54 = vld [vmem:[%s1 + $0x120] sm:$0xff]
  %v55 = vld [vmem:[%s1 + $0x128] sm:$0xff]
  %v56 = vld [vmem:[%s1 + $0x130] sm:$0xff]
  %v57 = vld [vmem:[%s1 + $0x138] sm:$0xff]
  %v58 = vld [vmem:[%s1 + $0x140] sm:$0xff]
  %v59 = vld [vmem:[%s1 + $0x148] sm:$0xff]
  %v60 = vld [vmem:[%s1 + $0x150] sm:$0xff]
  %v61 = vld [vmem:[%s1 + $0x158] sm:$0xff]
  %v62 = vld [vmem:[%s1 + $0x160] sm:$0xff]
  %v63 = vld [vmem:[%s1 + $0x168] sm:$0xff]
  %v64 = vld [vmem:[%s1 + $0x170] sm:$0xff]
  %v65 = vld [vmem:[%s1 + $0x178] sm:$0xff]
  %v66 = vld [vmem:[%s1 + $0x180] sm:$0xff]
  %v67 = vld [vmem:[%s1 + $0x188] sm:$0xff]
  %v68 = vld [vmem:[%s1 + $0x190] sm:$0xff]
  %v69 = vld [vmem:[%s1 + $0x198] sm:$0xff]
  %v70 = vld [vmem:[%s1 + $0x1a0] sm:$0xff]
  %v71 = vld [vmem:[%s1 + $0x1a8] sm:$0xff]
  %v72 = vld [vmem:[%s1 + $0x1b0] sm:$0xff]
  %v73 = vld [vmem:[%s1 + $0x1b8] sm:$0xff]
  %v74 = vld [vmem:[%s1 + $0x1c0] sm:$0xff]
  %v75 = vld [vmem:[%s1 + $0x1c8] sm:$0xff]
  %v76 = vld [vmem:[%s1 + $0x1d0] sm:$0xff]
  %v77 = vld [vmem:[%s1 + $0x1d8] sm:$0xff]
  %v78 = vld [vmem:[%s1 + $0x1e0] sm:$0xff]
  %v79 = vld [vmem:[%s1 + $0x1e8] sm:$0xff]
  %v80 = vld [vmem:[%s1 + $0x1f0] sm:$0xff]
  %v81 = vld [vmem:[%s1 + $0x1f8] sm:$0xff]
  %v82 = vld [vmem:[%s1 + $0x200] sm:$0xff]
  %v83 = vld [vmem:[%s1 + $0x208] sm:$0xff]
  %v84 = vld [vmem:[%s1 + $0x210] sm:$0xff]
  %v85 = vld [vmem:[%s1 + $0x218] sm:$0xff]
  %v86 = vld [vmem:[%s1 + $0x220] sm:$0xff]
  %v87 = vld [vmem:[%s1 + $0x228] sm:$0xff]
  %v88 = vld [vmem:[%s1 + $0x230] sm:$0xff]
  %v89 = vld [vmem:[%s1 + $0x238] sm:$0xff]
  %v90 = vld [vmem:[%s2] sm:$0xff]
  %v91 = vld [vmem:[%s2 + $0x8] sm:$0xff]
  %93 = vset.pattern.permute.xlu0 0
  %94 = vperm.xlu0 %93, %v90
  %v95 = vpop.permute.xlu0 %94
  %98 = vset.pattern.permute.xlu0 0
  %99 = vperm.xlu0 %98, %v91
  %v100 = vpop.permute.xlu0 %99
  %vm102 = vcmask 130048
  %v104 = vsel %vm102, %v15, 0
  %v107 = vsel %vm102, %v17, 0
  %109 = vmatprep.subr.mxu0 %v79
  %110 = vmatpush1.msra.mxu0 %v78
  %111 = vmatprep.subr.mxu0 %v75
  %112 = vmatpush1.msra.mxu0 %v74
  %113 = vmatprep.subr.mxu0 %v71
  %114 = vmatpush1.msra.mxu0 %v70
  %115 = vmatprep.subr.mxu0 %v67
  %116 = vmatpush1.msra.mxu0 %v66
  %117 = vmatprep.subr.mxu0 %v63
  %118 = vmatpush1.msra.mxu0 %v62
  %119 = vmatprep.subr.mxu0 %v59
  %120 = vmatpush1.msra.mxu0 %v58
  %121 = vmatprep.subr.mxu0 %v55
  %122 = vmatpush1.msra.mxu0 %v54
  %123 = vmatprep.subr.mxu0 %v51
  %124 = vmatpush1.msra.mxu0 %v50
  %125 = vmatprep.subr.mxu0 %v47
  %126 = vmatpush1.msra.mxu0 %v46
  %127 = vmatprep.subr.mxu0 %v43
  %128 = vmatpush1.msra.mxu0 %v42
  %129 = vmatprep.subr.mxu0 %v39
  %130 = vmatpush1.msra.mxu0 %v38
  %131 = vmatprep.subr.mxu0 %v35
  %132 = vmatpush1.msra.mxu0 %v34
  %133 = vmatprep.subr.mxu0 %v31
  %134 = vmatpush1.msra.mxu0 %v30
  %135 = vmatprep.subr.mxu0 %v27
  %136 = vmatpush1.msra.mxu0 %v26
  %137 = vmatprep.subr.mxu0 %v23
  %138 = vmatpush1.msra.mxu0 %v22
  %139 = vmatprep.subr.mxu0 %v19
  %140 = vmatpush1.msra.mxu0 %v18
  %141 = vmatprep.subr.mxu0 0.0
  %142 = vmatpush2.msra.mxu0 0.0
  %143 = vmatprep.subr.mxu0 0.0
  %144 = vmatpush2.msra.mxu0 0.0
  %145 = vmatprep.subr.mxu0 0.0
  %146 = vmatpush2.msra.mxu0 0.0
  %147 = vmatprep.subr.mxu0 0.0
  %148 = vmatpush2.msra.mxu0 0.0
  %149 = vmatprep.subr.mxu0 0.0
  %150 = vmatpush2.msra.mxu0 0.0
  %151 = vmatprep.subr.mxu0 0.0
  %152 = vmatpush2.msra.mxu0 0.0
  %153 = vmatprep.subr.mxu0 0.0
  %154 = vmatpush2.msra.mxu0 0.0
  %155 = vmatprep.subr.mxu0 0.0
  %156 = vmatpush2.msra.mxu0 0.0
  %157 = vmatprep.subr.mxu0 0.0
  %158 = vmatpush2.msra.mxu0 0.0
  %159 = vmatprep.subr.mxu0 0.0
  %160 = vmatpush2.msra.mxu0 0.0
  %161 = vmatprep.subr.mxu0 0.0
  %162 = vmatpush2.msra.mxu0 0.0
  %163 = vmatprep.subr.mxu0 0.0
  %164 = vmatpush2.msra.mxu0 0.0
  %165 = vmatprep.subr.mxu0 0.0
  %166 = vmatpush2.msra.mxu0 0.0
  %167 = vmatprep.subr.mxu0 0.0
  %168 = vmatpush2.msra.mxu0 0.0
  %169 = vmatprep.subr.mxu0 %v87
  %170 = vmatpush2.msra.mxu0 %v86
  %171 = vmatprep.subr.mxu0 %v83
  %172 = vmatpush2.msra.mxu0 %v82
  %173 = vmatprep.mubr.f32.mxu0 %v104
  %174 = vmatmul.mubr.f32.gmra.mxu0 %v14
  %v175 = vpop.f32.mrf.mxu0
  %v176 = vadd.f32 %v95, %v175
  %v177 = vpop.f32.mrf.mxu0
  %v178 = vadd.f32 %v95, %v177
  %179 = vmatprep.mubr.f32.mxu0 %v107
  %180 = vmatmul.mubr.f32.gmra.mxu0 %v16
  %v181 = vpop.f32.mrf.mxu0
  %v182 = vadd.f32 %v100, %v181
  %v183 = vpop.f32.mrf.mxu0
  %v184 = vadd.f32 %v100, %v183
  %185 = vdwg.mxu0
  %186 = vmatprep.subr.mxu0 %v81
  %187 = vmatpush1.msra.mxu0 %v80
  %188 = vmatprep.subr.mxu0 %v77
  %189 = vmatpush1.msra.mxu0 %v76
  %190 = vmatprep.subr.mxu0 %v73
  %191 = vmatpush1.msra.mxu0 %v72
  %192 = vmatprep.subr.mxu0 %v69
  %193 = vmatpush1.msra.mxu0 %v68
  %194 = vmatprep.subr.mxu0 %v65
  %195 = vmatpush1.msra.mxu0 %v64
  %196 = vmatprep.subr.mxu0 %v61
  %197 = vmatpush1.msra.mxu0 %v60
  %198 = vmatprep.subr.mxu0 %v57
  %199 = vmatpush1.msra.mxu0 %v56
  %200 = vmatprep.subr.mxu0 %v53
  %201 = vmatpush1.msra.mxu0 %v52
  %202 = vmatprep.subr.mxu0 %v49
  %203 = vmatpush1.msra.mxu0 %v48
  %204 = vmatprep.subr.mxu0 %v45
  %205 = vmatpush1.msra.mxu0 %v44
  %206 = vmatprep.subr.mxu0 %v41
  %207 = vmatpush1.msra.mxu0 %v40
  %208 = vmatprep.subr.mxu0 %v37
  %209 = vmatpush1.msra.mxu0 %v36
  %210 = vmatprep.subr.mxu0 %v33
  %211 = vmatpush1.msra.mxu0 %v32
  %212 = vmatprep.subr.mxu0 %v29
  %213 = vmatpush1.msra.mxu0 %v28
  %214 = vmatprep.subr.mxu0 %v25
  %215 = vmatpush1.msra.mxu0 %v24
  %216 = vmatprep.subr.mxu0 %v21
  %217 = vmatpush1.msra.mxu0 %v20
  %218 = vmatprep.subr.mxu0 0.0
  %219 = vmatpush2.msra.mxu0 0.0
  %220 = vmatprep.subr.mxu0 0.0
  %221 = vmatpush2.msra.mxu0 0.0
  %222 = vmatprep.subr.mxu0 0.0
  %223 = vmatpush2.msra.mxu0 0.0
  %224 = vmatprep.subr.mxu0 0.0
  %225 = vmatpush2.msra.mxu0 0.0
  %226 = vmatprep.subr.mxu0 0.0
  %227 = vmatpush2.msra.mxu0 0.0
  %228 = vmatprep.subr.mxu0 0.0
  %229 = vmatpush2.msra.mxu0 0.0
  %230 = vmatprep.subr.mxu0 0.0
  %231 = vmatpush2.msra.mxu0 0.0
  %232 = vmatprep.subr.mxu0 0.0
  %233 = vmatpush2.msra.mxu0 0.0
  %234 = vmatprep.subr.mxu0 0.0
  %235 = vmatpush2.msra.mxu0 0.0
  %236 = vmatprep.subr.mxu0 0.0
  %237 = vmatpush2.msra.mxu0 0.0
  %238 = vmatprep.subr.mxu0 0.0
  %239 = vmatpush2.msra.mxu0 0.0
  %240 = vmatprep.subr.mxu0 0.0
  %241 = vmatpush2.msra.mxu0 0.0
  %242 = vmatprep.subr.mxu0 0.0
  %243 = vmatpush2.msra.mxu0 0.0
  %244 = vmatprep.subr.mxu0 0.0
  %245 = vmatpush2.msra.mxu0 0.0
  %246 = vmatprep.subr.mxu0 %v89
  %247 = vmatpush2.msra.mxu0 %v88
  %248 = vmatprep.subr.mxu0 %v85
  %249 = vmatpush2.msra.mxu0 %v84
  %250 = vmatprep.mubr.f32.mxu0 %v104
  %251 = vmatmul.mubr.f32.gmra.mxu0 %v14
  %v252 = vpop.f32.mrf.mxu0
  %v253 = vadd.f32 %v95, %v252
  %v254 = vpop.f32.mrf.mxu0
  %v255 = vadd.f32 %v95, %v254
  %256 = vmatprep.mubr.f32.mxu0 %v107
  %257 = vmatmul.mubr.f32.gmra.mxu0 %v16
  %v258 = vpop.f32.mrf.mxu0
  %v259 = vadd.f32 %v100, %v258
  %v260 = vpop.f32.mrf.mxu0
  %v261 = vadd.f32 %v100, %v260
  %262 = vdwg.mxu0
  %263 = vst [vmem:[%s3] sm:$0xff] %v176
  %264 = vst [vmem:[%s3 + $0x8] sm:$0xff] %v178
  %265 = vst [vmem:[%s3 + $0x10] sm:$0xff] %v253
  %266 = vst [vmem:[%s3 + $0x18] sm:$0xff] %v255
  %267 = vst [vmem:[%s3 + $0x20] sm:$0xff] %v182
  %268 = vst [vmem:[%s3 + $0x28] sm:$0xff] %v184
  %269 = vst [vmem:[%s3 + $0x30] sm:$0xff] %v259
  %270 = vst [vmem:[%s3 + $0x38] sm:$0xff] %v261
  // Predicated region
  $region14: #{paa_kernel_forward.13} parent=0 // pred_check
    _
  $region15: #{paa_kernel_forward.13} parent=0 // pred_check_branch
    %272 = sbr.rel (0) target = $region17
  $region16: #{paa_kernel_forward.13} parent=0 // pred_region
    _
  $region17: #{paa_kernel_forward.13} parent=0 // pred_fallthru
    _
  // Predicated region
  $region18: #{paa_kernel_forward.13} parent=0 // pred_check
    _
  $region19: #{paa_kernel_forward.13} parent=0 // pred_check_branch
    %274 = sbr.rel (0) target = $region21
  $region20: #{paa_kernel_forward.13} parent=0 // pred_region
    _
  $region21: #{paa_kernel_forward.13} parent=0 // pred_fallthru
    _

</llo_original>
